<compile_context>
chip_gen: v5e
topology: v5e:2x2
jax: 0.10.0
libtpu: 0.0.40
codegen_flags: <defaults>
</compile_context>

<pallas_src>
import numpy as np
import jax
import jax.numpy as jnp
from jax.experimental import pallas as pl
from jax.experimental.pallas import tpu as pltpu

MULTIRES = 10
EMB_SIZE = MULTIRES * 6 + 3          # 63
HIDDEN = 32                          # SNeEncoder hidden_size
C_DIM = 32                           # slam.c_dim (feature dim)
N_BLOCKS = 5
SKIPS = (2,)

P_PAD = 8                            # p feature rows padded 3 -> 8 (sublane alignment)
F_PAD = 32                           # sin/cos rows padded 30 -> 32
EMB_PAD = P_PAD + 2 * F_PAD          # 72: packed [p | sin | cos] weight columns


# -------------------- plain-JAX glue --------------------

def normalize_3d_coordinate(p, bound):
    """Map world coords to [-1, 1] per axis using the scene bound (3, 2)."""
    lo = bound[:, 0]
    hi = bound[:, 1]
    return (p - lo) / (hi - lo) * 2.0 - 1.0


# TODO(synk): F.grid_sample (trilinear, border padding, align_corners=True) is a
# data-dependent gather with no clean rectangular-tile Pallas equivalent; kept in JAX.
def grid_sample_3d_cn(feat, coords):
    """feat: (C, D, H, W); coords: (N, 3) in [-1,1], ordered (x,y,z)->(W,H,D).
    Matches F.grid_sample(mode='bilinear', padding_mode='border', align_corners=True).
    Returns (C, N) (already transposed for the points-on-lanes kernel layout)."""
    C, D, H, W = feat.shape

    def unnorm(v, size):
        v = (v + 1.0) * 0.5 * (size - 1)      # align_corners=True
        return jnp.clip(v, 0.0, size - 1)     # padding_mode='border'

    x = unnorm(coords[:, 0], W)
    y = unnorm(coords[:, 1], H)
    z = unnorm(coords[:, 2], D)
    x0 = jnp.floor(x).astype(jnp.int32); x1 = jnp.minimum(x0 + 1, W - 1)
    y0 = jnp.floor(y).astype(jnp.int32); y1 = jnp.minimum(y0 + 1, H - 1)
    z0 = jnp.floor(z).astype(jnp.int32); z1 = jnp.minimum(z0 + 1, D - 1)
    xd = x - x0; yd = y - y0; zd = z - z0

    def g(zi, yi, xi):
        return feat[:, zi, yi, xi]            # (C, N)

    out = (g(z0, y0, x0) * ((1 - xd) * (1 - yd) * (1 - zd)) +
           g(z0, y0, x1) * (xd * (1 - yd) * (1 - zd)) +
           g(z0, y1, x0) * ((1 - xd) * yd * (1 - zd)) +
           g(z0, y1, x1) * (xd * yd * (1 - zd)) +
           g(z1, y0, x0) * ((1 - xd) * (1 - yd) * zd) +
           g(z1, y0, x1) * (xd * (1 - yd) * zd) +
           g(z1, y1, x0) * ((1 - xd) * yd * zd) +
           g(z1, y1, x1) * (xd * yd * zd))
    return out                                 # (C, N)


# -------------------- Pallas kernel --------------------

def _sne_kernel(p_ref, c_ref, fmat_ref, w0e_ref, w3e_ref, whid_ref, bpts_ref,
                wfc_ref, bfc_ref, wo_ref, bo_ref, out_ref):
    pT = p_ref[...]                                      # (P_PAD, TN), rows 3.. are zero
    cT = c_ref[...]                                      # (C_DIM, TN)

    def mm(a, b):
        return jnp.dot(a, b, preferred_element_type=jnp.float32)

    # --- nerf positional embedding, vectorized: arg[3k+d] = freqs[k] * p_d ---
    # Built with exact f32 broadcasts (no matmul -> no precision loss on p*512),
    # then 2 wide EUP calls instead of 20 small sin/cos launches + a 21-way concat.
    fm = fmat_ref[...]                                   # (F_PAD, 3) constant
    arg = (fm[:, 0:1] * pT[0:1, :]
           + fm[:, 1:2] * pT[1:2, :]
           + fm[:, 2:3] * pT[2:3, :])                    # (F_PAD, TN)
    sin_e = jnp.sin(arg)
    cos_e = jnp.cos(arg)                                 # padded rows give cos(0)=1; their weights are 0

    w0e = w0e_ref[...]                                   # (HIDDEN, EMB_PAD) packed [p|sin|cos]
    w3e = w3e_ref[...]
    whid = whid_ref[...]                                 # (4*HIDDEN, HIDDEN): [W1;W2;W3_h;W4]^T rows
    bpts = bpts_ref[...]                                 # (HIDDEN, N_BLOCKS) bias columns

    def emb_linear(we):
        # embedding linear, concat-free: split weight applied to [p | sin | cos]
        return (mm(we[:, :P_PAD], pT)
                + mm(we[:, P_PAD:P_PAD + F_PAD], sin_e)
                + mm(we[:, P_PAD + F_PAD:], cos_e))

    # --- fused fc_c: all 5 feature projections in one (160,32)x(32,TN) MXU matmul ---
    fc_all = mm(wfc_ref[...], cT) + bfc_ref[...]         # (5*HIDDEN, TN)

    def fc(i):
        return fc_all[i * HIDDEN:(i + 1) * HIDDEN, :]    # sublane-aligned slice

    def wh(i):
        return whid[i * HIDDEN:(i + 1) * HIDDEN, :]

    # layer 0: h = relu(pts_linears[0](embedded)) + fc_c[0](c)
    h = jnp.maximum(emb_linear(w0e) + bpts[:, 0:1], 0.0) + fc(0)
    # layers 1, 2
    h = jnp.maximum(mm(wh(0), h) + bpts[:, 1:2], 0.0) + fc(1)
    h = jnp.maximum(mm(wh(1), h) + bpts[:, 2:3], 0.0) + fc(2)
    # layer 3: original input is cat([embedded, h]); the concat is folded into split weights
    h = jnp.maximum(mm(wh(2), h) + emb_linear(w3e) + bpts[:, 3:4], 0.0) + fc(3)
    # layer 4
    h = jnp.maximum(mm(wh(3), h) + bpts[:, 4:5], 0.0) + fc(4)

    # output linear (HIDDEN -> 1) as multiply + sublane reduce; lane-dense (1, TN) store
    out_ref[...] = jnp.sum(h * wo_ref[...], axis=0, keepdims=True) + bo_ref[...]


# -------------------- parameter packing (once, in the wrapper) --------------------

def _prepare_params(params):
    freqs = np.linspace(1.0, 2.0 ** (MULTIRES - 1), MULTIRES).astype(np.float32)

    # arg[3k + d] = freqs[k] * p_d ;  rows 30,31 stay zero (padding)
    fmat = np.zeros((F_PAD, 3), np.float32)
    for k in range(MULTIRES):
        for d in range(3):
            fmat[3 * k + d, d] = freqs[k]
    fmat = jnp.asarray(fmat)

    # original embedding row order: [p(3), sin(f0)(3), cos(f0)(3), sin(f1)(3), ...]
    sin_rows = np.array([3 + 6 * k + d for k in range(MULTIRES) for d in range(3)])
    cos_rows = sin_rows + 3

    def split_emb_weight(w):
        """(EMB_SIZE, HIDDEN) in torch-cat order -> (HIDDEN, EMB_PAD) packed [p|sin|cos]."""
        wp = jnp.zeros((P_PAD, HIDDEN), jnp.float32).at[:3].set(w[:3])
        ws = jnp.zeros((F_PAD, HIDDEN), jnp.float32).at[:3 * MULTIRES].set(w[sin_rows])
        wc = jnp.zeros((F_PAD, HIDDEN), jnp.float32).at[:3 * MULTIRES].set(w[cos_rows])
        return jnp.concatenate([wp, ws, wc], axis=0).T

    w0, _ = params["pts"][0]
    w3, _ = params["pts"][3]
    w0e = split_emb_weight(w0)                     # (HIDDEN, EMB_PAD)
    w3e = split_emb_weight(w3[:EMB_SIZE])          # (HIDDEN, EMB_PAD)
    w3h = w3[EMB_SIZE:].T                          # (HIDDEN, HIDDEN)

    whid = jnp.concatenate([params["pts"][1][0].T, params["pts"][2][0].T,
                            w3h, params["pts"][4][0].T], axis=0)          # (4H, H)
    bpts = jnp.concatenate([params["pts"][i][1].T for i in range(N_BLOCKS)],
                           axis=1)                                        # (H, 5)

    wfc = jnp.concatenate([w for (w, _) in params["fc_c"]], axis=1).T     # (5H, C_DIM)
    bfc = jnp.concatenate([b for (_, b) in params["fc_c"]], axis=1).T     # (5H, 1)

    wo, bo = params["out"]                                                # (H,1), (1,1)
    return (fmat, w0e, w3e, whid, bpts, wfc, bfc, wo, bo)


# -------------------- wrapper --------------------

def sne_encoder_forward(p, c_grid, params, bound, *, tile_n=1024):
    """p: (N, 3); c_grid: (1, C_DIM, D, H, W).  Returns (N, 4) with occ in col 3.

    tile_n: points per grid step (multiple of 128).  Large tiles amortize the
    ~0.35us/step pipeline overhead; keep at least 2 grid steps on v7x so both
    TensorCores get work (the grid axis is marked "parallel")."""
    n = p.shape[0]
    p = p.astype(jnp.float32)

    # glue: feature sampling (data-dependent trilinear gather) stays in JAX
    p_nor = normalize_3d_coordinate(p, bound)
    c_t = grid_sample_3d_cn(c_grid[0].astype(jnp.float32), p_nor)   # (C_DIM, N)

    # points-on-lanes input; only the tiny feature axis of p is padded (3 -> 8 rows),
    # the point axis is NOT padded (grid uses cdiv + Pallas edge-block handling).
    p_t = jnp.zeros((P_PAD, n), jnp.float32).at[:3, :].set(p.T)

    packed = _prepare_params(params)

    num_tiles = pl.cdiv(n, tile_n)
    tiled = lambda i: (0, i)
    whole = lambda i: (0, 0)

    in_specs = ([pl.BlockSpec((P_PAD, tile_n), tiled),
                 pl.BlockSpec((C_DIM, tile_n), tiled)]
                + [pl.BlockSpec(a.shape, whole) for a in packed])

    occ_row = pl.pallas_call(
        _sne_kernel,
        out_shape=jax.ShapeDtypeStruct((1, num_tiles * tile_n), jnp.float32),
        grid_spec=pltpu.PrefetchScalarGridSpec(
            num_scalar_prefetch=0,
            grid=(num_tiles,),
            in_specs=in_specs,
            out_specs=pl.BlockSpec((1, tile_n), tiled),
        ),
        compiler_params=pltpu.CompilerParams(dimension_semantics=("parallel",)),
    )(p_t, c_t, *packed)

    occ = occ_row[0, :n]
    # raw = zeros(N, 4); raw[:, -1] = occ  (assembled outside the kernel so the
    # kernel output stays lane-dense)
    return jnp.zeros((n, 4), jnp.float32).at[:, 3].set(occ)


# -------------------- deterministic parameter init --------------------

def init_params(key):
    ks = iter(jax.random.split(key, 40))

    def xavier(k, fan_in, fan_out, gain):
        limit = gain * np.sqrt(6.0 / (fan_in + fan_out))
        return jax.random.uniform(k, (fan_in, fan_out), jnp.float32, -limit, limit)

    gain_relu = float(np.sqrt(2.0))
    pts_dims = [(EMB_SIZE, HIDDEN), (HIDDEN, HIDDEN), (HIDDEN, HIDDEN),
                (HIDDEN + EMB_SIZE, HIDDEN), (HIDDEN, HIDDEN)]
    pts = [(xavier(next(ks), fi, fo, gain_relu), jnp.zeros((1, fo), jnp.float32))
           for (fi, fo) in pts_dims]

    fc_c = []
    lim = float(np.sqrt(1.0 / C_DIM))            # nn.Linear default-style init
    for _ in range(N_BLOCKS):
        w = jax.random.uniform(next(ks), (C_DIM, HIDDEN), jnp.float32, -lim, lim)
        b = jax.random.uniform(next(ks), (1, HIDDEN), jnp.float32, -lim, lim)
        fc_c.append((w, b))

    wo = xavier(next(ks), HIDDEN, 1, 1.0)        # output_linear, 'linear' gain = 1
    bo = jnp.zeros((1, 1), jnp.float32)
    return {"pts": pts, "fc_c": fc_c, "out": (wo, bo)}


# -------------------- pure-JAX reference (for verification) --------------------

def reference_forward(p, c_grid, params, bound):
    p = p.astype(jnp.float32)
    p_nor = normalize_3d_coordinate(p, bound)
    c = grid_sample_3d_cn(c_grid[0].astype(jnp.float32), p_nor).T    # (N, C)
    # NOTE: torch.linspace(2**0, 2**(multires-1), multires) -> linearly spaced freqs,
    # matching the original module's nerf_pos_embed (kernel uses the same schedule).
    freqs = np.linspace(1.0, 2.0 ** (MULTIRES - 1), MULTIRES)
    parts = [p]
    for f in freqs:
        parts.append(jnp.sin(p * float(f)))
        parts.append(jnp.cos(p * float(f)))
    embedded = jnp.concatenate(parts, -1)
    h = embedded
    for i in range(N_BLOCKS):
        w, b = params["pts"][i]
        wc, bc = params["fc_c"][i]
        h = jax.nn.relu(h @ w + b)
        h = h + (c @ wc + bc)
        if i in SKIPS:
            h = jnp.concatenate([embedded, h], -1)
    occ = (h @ params["out"][0] + params["out"][1])[:, 0]
    return jnp.zeros((p.shape[0], 4), jnp.float32).at[:, 3].set(occ)


if __name__ == "__main__":
    key = jax.random.PRNGKey(0)
    kp, kg, kw = jax.random.split(key, 3)

    N = 300                     # not a multiple of the tile -> exercises the ragged edge tile
    D = H = W = 8
    bound = jnp.array([[-1.0, 1.0], [-1.0, 1.0], [-1.0, 1.0]], jnp.float32)
    p = jax.random.uniform(kp, (N, 3), jnp.float32, -1.0, 1.0)
    c_grid = jax.random.normal(kg, (1, C_DIM, D, H, W), jnp.float32) * 0.1
    params = init_params(kw)

    # small tile so the tiny test still exercises multiple grid steps; production
    # default is tile_n=1024
    raw = sne_encoder_forward(p, c_grid, params, bound, tile_n=128)
    raw = jax.block_until_ready(raw)

    ref = reference_forward(p, c_grid, params, bound)
    np.testing.assert_allclose(np.asarray(raw), np.asarray(ref), atol=5e-3, rtol=5e-3)
    assert raw.shape == (N, 4) and bool(jnp.all(raw[:, :3] == 0.0))
    print("KERNEL_OK")
</pallas_src>

<mosaic_0001>
module attributes {stable_mosaic.version = 11 : i64} {
  func.func @_sne_kernel(%arg0: i32, %arg1: memref<8x128xf32, #tpu.memory_space<vmem>>, %arg2: memref<32x128xf32, #tpu.memory_space<vmem>>, %arg3: memref<32x3xf32, #tpu.memory_space<vmem>>, %arg4: memref<32x72xf32, #tpu.memory_space<vmem>>, %arg5: memref<32x72xf32, #tpu.memory_space<vmem>>, %arg6: memref<128x32xf32, #tpu.memory_space<vmem>>, %arg7: memref<32x5xf32, #tpu.memory_space<vmem>>, %arg8: memref<160x32xf32, #tpu.memory_space<vmem>>, %arg9: memref<160x1xf32, #tpu.memory_space<vmem>>, %arg10: memref<32x1xf32, #tpu.memory_space<vmem>>, %arg11: memref<1x1xf32, #tpu.memory_space<vmem>>, %arg12: memref<1x128xf32, #tpu.memory_space<vmem>>) attributes {dimension_semantics = [#tpu.dimension_semantics<parallel>], iteration_bounds = array<i64: 3>, scalar_prefetch = 0 : i64, scratch_operands = 0 : i64, tpu.core_type = #tpu.core_type<tc>, window_params = [{transform_indices = @transform_0, window_bounds = array<i64: 8, 128>}, {transform_indices = @transform_1, window_bounds = array<i64: 32, 128>}, {pipeline_mode = #tpu.pipeline_mode<synchronous>, transform_indices = @transform_2, window_bounds = array<i64: 32, 3>}, {pipeline_mode = #tpu.pipeline_mode<synchronous>, transform_indices = @transform_3, window_bounds = array<i64: 32, 72>}, {pipeline_mode = #tpu.pipeline_mode<synchronous>, transform_indices = @transform_4, window_bounds = array<i64: 32, 72>}, {pipeline_mode = #tpu.pipeline_mode<synchronous>, transform_indices = @transform_5, window_bounds = array<i64: 128, 32>}, {pipeline_mode = #tpu.pipeline_mode<synchronous>, transform_indices = @transform_6, window_bounds = array<i64: 32, 5>}, {pipeline_mode = #tpu.pipeline_mode<synchronous>, transform_indices = @transform_7, window_bounds = array<i64: 160, 32>}, {pipeline_mode = #tpu.pipeline_mode<synchronous>, transform_indices = @transform_8, window_bounds = array<i64: 160, 1>}, {pipeline_mode = #tpu.pipeline_mode<synchronous>, transform_indices = @transform_9, window_bounds = array<i64: 32, 1>}, {pipeline_mode = #tpu.pipeline_mode<synchronous>, transform_indices = @transform_10, window_bounds = array<i64: 1, 1>}, {transform_indices = @transform_11, window_bounds = array<i64: 1, 128>}]} {
    %c0 = arith.constant 0 : index
    %c0_0 = arith.constant 0 : index
    %0 = vector.load %arg1[%c0, %c0_0] : memref<8x128xf32, #tpu.memory_space<vmem>>, vector<8x128xf32>
    %c0_1 = arith.constant 0 : index
    %c0_2 = arith.constant 0 : index
    %1 = vector.load %arg2[%c0_1, %c0_2] : memref<32x128xf32, #tpu.memory_space<vmem>>, vector<32x128xf32>
    %c0_3 = arith.constant 0 : index
    %c0_4 = arith.constant 0 : index
    %2 = vector.load %arg3[%c0_3, %c0_4] : memref<32x3xf32, #tpu.memory_space<vmem>>, vector<32x3xf32>
    %3 = vector.extract_strided_slice %2 {offsets = [0, 0], sizes = [32, 1], strides = [1, 1]} : vector<32x3xf32> to vector<32x1xf32>
    %4 = vector.extract_strided_slice %0 {offsets = [0, 0], sizes = [1, 128], strides = [1, 1]} : vector<8x128xf32> to vector<1x128xf32>
    %5 = vector.broadcast %3 : vector<32x1xf32> to vector<32x128xf32>
    %6 = vector.broadcast %4 : vector<1x128xf32> to vector<32x128xf32>
    %7 = arith.mulf %5, %6 : vector<32x128xf32>
    %8 = vector.extract_strided_slice %2 {offsets = [0, 1], sizes = [32, 1], strides = [1, 1]} : vector<32x3xf32> to vector<32x1xf32>
    %9 = vector.extract_strided_slice %0 {offsets = [1, 0], sizes = [1, 128], strides = [1, 1]} : vector<8x128xf32> to vector<1x128xf32>
    %10 = vector.broadcast %8 : vector<32x1xf32> to vector<32x128xf32>
    %11 = vector.broadcast %9 : vector<1x128xf32> to vector<32x128xf32>
    %12 = arith.mulf %10, %11 : vector<32x128xf32>
    %13 = arith.addf %7, %12 : vector<32x128xf32>
    %14 = vector.extract_strided_slice %2 {offsets = [0, 2], sizes = [32, 1], strides = [1, 1]} : vector<32x3xf32> to vector<32x1xf32>
    %15 = vector.extract_strided_slice %0 {offsets = [2, 0], sizes = [1, 128], strides = [1, 1]} : vector<8x128xf32> to vector<1x128xf32>
    %16 = vector.broadcast %14 : vector<32x1xf32> to vector<32x128xf32>
    %17 = vector.broadcast %15 : vector<1x128xf32> to vector<32x128xf32>
    %18 = arith.mulf %16, %17 : vector<32x128xf32>
    %19 = arith.addf %13, %18 : vector<32x128xf32>
    %20 = math.sin %19 : vector<32x128xf32>
    %21 = math.cos %19 : vector<32x128xf32>
    %c0_5 = arith.constant 0 : index
    %c0_6 = arith.constant 0 : index
    %22 = vector.load %arg4[%c0_5, %c0_6] : memref<32x72xf32, #tpu.memory_space<vmem>>, vector<32x72xf32>
    %c0_7 = arith.constant 0 : index
    %c0_8 = arith.constant 0 : index
    %23 = vector.load %arg5[%c0_7, %c0_8] : memref<32x72xf32, #tpu.memory_space<vmem>>, vector<32x72xf32>
    %c0_9 = arith.constant 0 : index
    %c0_10 = arith.constant 0 : index
    %24 = vector.load %arg6[%c0_9, %c0_10] : memref<128x32xf32, #tpu.memory_space<vmem>>, vector<128x32xf32>
    %c0_11 = arith.constant 0 : index
    %c0_12 = arith.constant 0 : index
    %25 = vector.load %arg7[%c0_11, %c0_12] : memref<32x5xf32, #tpu.memory_space<vmem>>, vector<32x5xf32>
    %c0_13 = arith.constant 0 : index
    %c0_14 = arith.constant 0 : index
    %26 = vector.load %arg8[%c0_13, %c0_14] : memref<160x32xf32, #tpu.memory_space<vmem>>, vector<160x32xf32>
    %cst = arith.constant dense<0.000000e+00> : vector<160x128xf32>
    %27 = tpu.matmul %26, %1, %cst {dimension_numbers = #tpu.dot_dimension_numbers<[1], [0], [0], [1], [0, 0, 1, 1], [], []>} : vector<160x32xf32>, vector<32x128xf32>, vector<160x128xf32> -> vector<160x128xf32>
    %c0_15 = arith.constant 0 : index
    %c0_16 = arith.constant 0 : index
    %28 = vector.load %arg9[%c0_15, %c0_16] : memref<160x1xf32, #tpu.memory_space<vmem>>, vector<160x1xf32>
    %29 = vector.broadcast %28 : vector<160x1xf32> to vector<160x128xf32>
    %30 = arith.addf %27, %29 : vector<160x128xf32>
    %31 = vector.extract_strided_slice %22 {offsets = [0, 0], sizes = [32, 8], strides = [1, 1]} : vector<32x72xf32> to vector<32x8xf32>
    %cst_17 = arith.constant dense<0.000000e+00> : vector<32x128xf32>
    %32 = tpu.matmul %31, %0, %cst_17 {dimension_numbers = #tpu.dot_dimension_numbers<[1], [0], [0], [1], [0, 0, 1, 1], [], []>} : vector<32x8xf32>, vector<8x128xf32>, vector<32x128xf32> -> vector<32x128xf32>
    %33 = vector.extract_strided_slice %22 {offsets = [0, 8], sizes = [32, 32], strides = [1, 1]} : vector<32x72xf32> to vector<32x32xf32>
    %cst_18 = arith.constant dense<0.000000e+00> : vector<32x128xf32>
    %34 = tpu.matmul %33, %20, %cst_18 {dimension_numbers = #tpu.dot_dimension_numbers<[1], [0], [0], [1], [0, 0, 1, 1], [], []>} : vector<32x32xf32>, vector<32x128xf32>, vector<32x128xf32> -> vector<32x128xf32>
    %35 = arith.addf %32, %34 : vector<32x128xf32>
    %36 = vector.extract_strided_slice %22 {offsets = [0, 40], sizes = [32, 32], strides = [1, 1]} : vector<32x72xf32> to vector<32x32xf32>
    %cst_19 = arith.constant dense<0.000000e+00> : vector<32x128xf32>
    %37 = tpu.matmul %36, %21, %cst_19 {dimension_numbers = #tpu.dot_dimension_numbers<[1], [0], [0], [1], [0, 0, 1, 1], [], []>} : vector<32x32xf32>, vector<32x128xf32>, vector<32x128xf32> -> vector<32x128xf32>
    %38 = arith.addf %35, %37 : vector<32x128xf32>
    %39 = vector.extract_strided_slice %25 {offsets = [0, 0], sizes = [32, 1], strides = [1, 1]} : vector<32x5xf32> to vector<32x1xf32>
    %40 = vector.broadcast %39 : vector<32x1xf32> to vector<32x128xf32>
    %41 = arith.addf %38, %40 : vector<32x128xf32>
    %cst_20 = arith.constant 0.000000e+00 : f32
    %42 = vector.broadcast %cst_20 : f32 to vector<32x128xf32>
    %43 = arith.maximumf %41, %42 : vector<32x128xf32>
    %44 = vector.extract_strided_slice %30 {offsets = [0, 0], sizes = [32, 128], strides = [1, 1]} : vector<160x128xf32> to vector<32x128xf32>
    %45 = arith.addf %43, %44 : vector<32x128xf32>
    %46 = vector.extract_strided_slice %24 {offsets = [0, 0], sizes = [32, 32], strides = [1, 1]} : vector<128x32xf32> to vector<32x32xf32>
    %cst_21 = arith.constant dense<0.000000e+00> : vector<32x128xf32>
    %47 = tpu.matmul %46, %45, %cst_21 {dimension_numbers = #tpu.dot_dimension_numbers<[1], [0], [0], [1], [0, 0, 1, 1], [], []>} : vector<32x32xf32>, vector<32x128xf32>, vector<32x128xf32> -> vector<32x128xf32>
    %48 = vector.extract_strided_slice %25 {offsets = [0, 1], sizes = [32, 1], strides = [1, 1]} : vector<32x5xf32> to vector<32x1xf32>
    %49 = vector.broadcast %48 : vector<32x1xf32> to vector<32x128xf32>
    %50 = arith.addf %47, %49 : vector<32x128xf32>
    %cst_22 = arith.constant 0.000000e+00 : f32
    %51 = vector.broadcast %cst_22 : f32 to vector<32x128xf32>
    %52 = arith.maximumf %50, %51 : vector<32x128xf32>
    %53 = vector.extract_strided_slice %30 {offsets = [32, 0], sizes = [32, 128], strides = [1, 1]} : vector<160x128xf32> to vector<32x128xf32>
    %54 = arith.addf %52, %53 : vector<32x128xf32>
    %55 = vector.extract_strided_slice %24 {offsets = [32, 0], sizes = [32, 32], strides = [1, 1]} : vector<128x32xf32> to vector<32x32xf32>
    %cst_23 = arith.constant dense<0.000000e+00> : vector<32x128xf32>
    %56 = tpu.matmul %55, %54, %cst_23 {dimension_numbers = #tpu.dot_dimension_numbers<[1], [0], [0], [1], [0, 0, 1, 1], [], []>} : vector<32x32xf32>, vector<32x128xf32>, vector<32x128xf32> -> vector<32x128xf32>
    %57 = vector.extract_strided_slice %25 {offsets = [0, 2], sizes = [32, 1], strides = [1, 1]} : vector<32x5xf32> to vector<32x1xf32>
    %58 = vector.broadcast %57 : vector<32x1xf32> to vector<32x128xf32>
    %59 = arith.addf %56, %58 : vector<32x128xf32>
    %cst_24 = arith.constant 0.000000e+00 : f32
    %60 = vector.broadcast %cst_24 : f32 to vector<32x128xf32>
    %61 = arith.maximumf %59, %60 : vector<32x128xf32>
    %62 = vector.extract_strided_slice %30 {offsets = [64, 0], sizes = [32, 128], strides = [1, 1]} : vector<160x128xf32> to vector<32x128xf32>
    %63 = arith.addf %61, %62 : vector<32x128xf32>
    %64 = vector.extract_strided_slice %24 {offsets = [64, 0], sizes = [32, 32], strides = [1, 1]} : vector<128x32xf32> to vector<32x32xf32>
    %cst_25 = arith.constant dense<0.000000e+00> : vector<32x128xf32>
    %65 = tpu.matmul %64, %63, %cst_25 {dimension_numbers = #tpu.dot_dimension_numbers<[1], [0], [0], [1], [0, 0, 1, 1], [], []>} : vector<32x32xf32>, vector<32x128xf32>, vector<32x128xf32> -> vector<32x128xf32>
    %66 = vector.extract_strided_slice %23 {offsets = [0, 0], sizes = [32, 8], strides = [1, 1]} : vector<32x72xf32> to vector<32x8xf32>
    %cst_26 = arith.constant dense<0.000000e+00> : vector<32x128xf32>
    %67 = tpu.matmul %66, %0, %cst_26 {dimension_numbers = #tpu.dot_dimension_numbers<[1], [0], [0], [1], [0, 0, 1, 1], [], []>} : vector<32x8xf32>, vector<8x128xf32>, vector<32x128xf32> -> vector<32x128xf32>
    %68 = vector.extract_strided_slice %23 {offsets = [0, 8], sizes = [32, 32], strides = [1, 1]} : vector<32x72xf32> to vector<32x32xf32>
    %cst_27 = arith.constant dense<0.000000e+00> : vector<32x128xf32>
    %69 = tpu.matmul %68, %20, %cst_27 {dimension_numbers = #tpu.dot_dimension_numbers<[1], [0], [0], [1], [0, 0, 1, 1], [], []>} : vector<32x32xf32>, vector<32x128xf32>, vector<32x128xf32> -> vector<32x128xf32>
    %70 = arith.addf %67, %69 : vector<32x128xf32>
    %71 = vector.extract_strided_slice %23 {offsets = [0, 40], sizes = [32, 32], strides = [1, 1]} : vector<32x72xf32> to vector<32x32xf32>
    %cst_28 = arith.constant dense<0.000000e+00> : vector<32x128xf32>
    %72 = tpu.matmul %71, %21, %cst_28 {dimension_numbers = #tpu.dot_dimension_numbers<[1], [0], [0], [1], [0, 0, 1, 1], [], []>} : vector<32x32xf32>, vector<32x128xf32>, vector<32x128xf32> -> vector<32x128xf32>
    %73 = arith.addf %70, %72 : vector<32x128xf32>
    %74 = arith.addf %65, %73 : vector<32x128xf32>
    %75 = vector.extract_strided_slice %25 {offsets = [0, 3], sizes = [32, 1], strides = [1, 1]} : vector<32x5xf32> to vector<32x1xf32>
    %76 = vector.broadcast %75 : vector<32x1xf32> to vector<32x128xf32>
    %77 = arith.addf %74, %76 : vector<32x128xf32>
    %cst_29 = arith.constant 0.000000e+00 : f32
    %78 = vector.broadcast %cst_29 : f32 to vector<32x128xf32>
    %79 = arith.maximumf %77, %78 : vector<32x128xf32>
    %80 = vector.extract_strided_slice %30 {offsets = [96, 0], sizes = [32, 128], strides = [1, 1]} : vector<160x128xf32> to vector<32x128xf32>
    %81 = arith.addf %79, %80 : vector<32x128xf32>
    %82 = vector.extract_strided_slice %24 {offsets = [96, 0], sizes = [32, 32], strides = [1, 1]} : vector<128x32xf32> to vector<32x32xf32>
    %cst_30 = arith.constant dense<0.000000e+00> : vector<32x128xf32>
    %83 = tpu.matmul %82, %81, %cst_30 {dimension_numbers = #tpu.dot_dimension_numbers<[1], [0], [0], [1], [0, 0, 1, 1], [], []>} : vector<32x32xf32>, vector<32x128xf32>, vector<32x128xf32> -> vector<32x128xf32>
    %84 = vector.extract_strided_slice %25 {offsets = [0, 4], sizes = [32, 1], strides = [1, 1]} : vector<32x5xf32> to vector<32x1xf32>
    %85 = vector.broadcast %84 : vector<32x1xf32> to vector<32x128xf32>
    %86 = arith.addf %83, %85 : vector<32x128xf32>
    %cst_31 = arith.constant 0.000000e+00 : f32
    %87 = vector.broadcast %cst_31 : f32 to vector<32x128xf32>
    %88 = arith.maximumf %86, %87 : vector<32x128xf32>
    %89 = vector.extract_strided_slice %30 {offsets = [128, 0], sizes = [32, 128], strides = [1, 1]} : vector<160x128xf32> to vector<32x128xf32>
    %90 = arith.addf %88, %89 : vector<32x128xf32>
    %c0_32 = arith.constant 0 : index
    %c0_33 = arith.constant 0 : index
    %91 = vector.load %arg10[%c0_32, %c0_33] : memref<32x1xf32, #tpu.memory_space<vmem>>, vector<32x1xf32>
    %92 = vector.broadcast %91 : vector<32x1xf32> to vector<32x128xf32>
    %93 = arith.mulf %90, %92 : vector<32x128xf32>
    %cst_34 = arith.constant dense<0.000000e+00> : vector<128xf32>
    %94 = vector.multi_reduction <add>, %93, %cst_34 [0] : vector<32x128xf32> to vector<128xf32>
    %95 = vector.shape_cast %94 : vector<128xf32> to vector<1x128xf32>
    %c0_35 = arith.constant 0 : index
    %c0_36 = arith.constant 0 : index
    %96 = vector.load %arg11[%c0_35, %c0_36] : memref<1x1xf32, #tpu.memory_space<vmem>>, vector<1x1xf32>
    %97 = vector.broadcast %96 : vector<1x1xf32> to vector<1x128xf32>
    %98 = arith.addf %95, %97 : vector<1x128xf32>
    %c0_37 = arith.constant 0 : index
    %c0_38 = arith.constant 0 : index
    %99 = vector.load %arg12[%c0_37, %c0_38] : memref<1x128xf32, #tpu.memory_space<vmem>>, vector<1x128xf32>
    tpu.vector_store %arg12[%c0_37, %c0_38], %98 {strides = array<i32>} : memref<1x128xf32, #tpu.memory_space<vmem>>, vector<1x128xf32>,
    return
  }
  func.func @transform_0(%arg0: i32) -> (i32, i32) {
    %c0_i32 = arith.constant 0 : i32
    %c0_i32_0 = arith.constant 0 : i32
    return %c0_i32, %arg0 : i32, i32
  }
  func.func @transform_1(%arg0: i32) -> (i32, i32) {
    %c0_i32 = arith.constant 0 : i32
    %c0_i32_0 = arith.constant 0 : i32
    return %c0_i32, %arg0 : i32, i32
  }
  func.func @transform_2(%arg0: i32) -> (i32, i32) {
    %c0_i32 = arith.constant 0 : i32
    %c0_i32_0 = arith.constant 0 : i32
    %c0_i32_1 = arith.constant 0 : i32
    return %c0_i32, %c0_i32_0 : i32, i32
  }
  func.func @transform_3(%arg0: i32) -> (i32, i32) {
    %c0_i32 = arith.constant 0 : i32
    %c0_i32_0 = arith.constant 0 : i32
    %c0_i32_1 = arith.constant 0 : i32
    return %c0_i32, %c0_i32_0 : i32, i32
  }
  func.func @transform_4(%arg0: i32) -> (i32, i32) {
    %c0_i32 = arith.constant 0 : i32
    %c0_i32_0 = arith.constant 0 : i32
    %c0_i32_1 = arith.constant 0 : i32
    return %c0_i32, %c0_i32_0 : i32, i32
  }
  func.func @transform_5(%arg0: i32) -> (i32, i32) {
    %c0_i32 = arith.constant 0 : i32
    %c0_i32_0 = arith.constant 0 : i32
    %c0_i32_1 = arith.constant 0 : i32
    return %c0_i32, %c0_i32_0 : i32, i32
  }
  func.func @transform_6(%arg0: i32) -> (i32, i32) {
    %c0_i32 = arith.constant 0 : i32
    %c0_i32_0 = arith.constant 0 : i32
    %c0_i32_1 = arith.constant 0 : i32
    return %c0_i32, %c0_i32_0 : i32, i32
  }
  func.func @transform_7(%arg0: i32) -> (i32, i32) {
    %c0_i32 = arith.constant 0 : i32
    %c0_i32_0 = arith.constant 0 : i32
    %c0_i32_1 = arith.constant 0 : i32
    return %c0_i32, %c0_i32_0 : i32, i32
  }
  func.func @transform_8(%arg0: i32) -> (i32, i32) {
    %c0_i32 = arith.constant 0 : i32
    %c0_i32_0 = arith.constant 0 : i32
    %c0_i32_1 = arith.constant 0 : i32
    return %c0_i32, %c0_i32_0 : i32, i32
  }
  func.func @transform_9(%arg0: i32) -> (i32, i32) {
    %c0_i32 = arith.constant 0 : i32
    %c0_i32_0 = arith.constant 0 : i32
    %c0_i32_1 = arith.constant 0 : i32
    return %c0_i32, %c0_i32_0 : i32, i32
  }
  func.func @transform_10(%arg0: i32) -> (i32, i32) {
    %c0_i32 = arith.constant 0 : i32
    %c0_i32_0 = arith.constant 0 : i32
    %c0_i32_1 = arith.constant 0 : i32
    return %c0_i32, %c0_i32_0 : i32, i32
  }
  func.func @transform_11(%arg0: i32) -> (i32, i32) {
    %c0_i32 = arith.constant 0 : i32
    %c0_i32_0 = arith.constant 0 : i32
    return %c0_i32, %arg0 : i32, i32
  }
}

</mosaic_0001>

<llo_original>
// kernel: tpu_custom_call.1
$region0: #{tpu_custom_call.1}
  #allocation0 [shape = 'u32[]', space=smem, size = 0x4, offset = 0x4, fixed_abs, tag = 'smem constant byte address 0x4 - core index']
  #allocation1 [shape = 'u32[72,128]{1,0:T(1,128)}', space=vmem, size = 0x9000, scoped, tag = 'internal scratch']
  #allocation2 [shape = 'f32[1,1]{1,0:T(1,128)S(1)}', space=vmem, size = 0x200, scoped, tag = 'scoped memory for tpu_custom_call.1']
  %s0 = inlined_call_operand.vmem [shape: f32[8,300], index: 0, kind: input, shape index: {}]
  %s1 = inlined_call_operand.vmem [shape: f32[32,300], index: 1, kind: input, shape index: {}]
  %s2 = inlined_call_operand.vmem [shape: f32[32,3], index: 2, kind: input, shape index: {}]
  %s3 = inlined_call_operand.vmem [shape: f32[32,72], index: 3, kind: input, shape index: {}]
  %s4 = inlined_call_operand.vmem [shape: f32[32,72], index: 4, kind: input, shape index: {}]
  %s5 = inlined_call_operand.vmem [shape: f32[128,32], index: 5, kind: input, shape index: {}]
  %s6 = inlined_call_operand.vmem [shape: f32[32,5], index: 6, kind: input, shape index: {}]
  %s7 = inlined_call_operand.vmem [shape: f32[160,32], index: 7, kind: input, shape index: {}]
  %s8 = inlined_call_operand.vmem [shape: f32[160,1], index: 8, kind: input, shape index: {}]
  %s9 = inlined_call_operand.vmem [shape: f32[32,1], index: 9, kind: input, shape index: {}]
  %s10 = inlined_call_operand.<no memory space> [shape: f32[1,1], index: 10, kind: input, shape index: {}]
  %s11 = inlined_call_operand.hbm [shape: f32[1,384], index: 11, kind: output, shape index: {}]
  %s12 = sld [smem:[#allocation0]]
  $region115: #{tpu_custom_call.1} parent=0
    _
  %s14 = ssub.s32 1, %s12
  %s15 = scalar_select 0, %s14, %s12
  %v16 = vstv %s10
  %17 = vst [vmem:[#allocation2] sm:$0x1] %v16
  $region1: #{tpu_custom_call.1} parent=0
    #allocation3 [shape = 'u8[32768]{0}', space=vmem, size = 0x8000, scoped, tag = 'input window, operand 1']
    #allocation4 [shape = 'u8[1024]{0}', space=vmem, size = 0x400, scoped, tag = 'output window, operand 0']
    #allocation5 [shape = 's32[2]{0}', space=sflag, size = 0x8, scoped, tag = 'scoped memory for tpu_custom_call.1']
    %18 = vsyncpa [#allocation5], 0
    %s19 = scalar_lea.sflag [#allocation5], 1
    %20 = vsyncpa %s19, 0
    loop: start=0, step=1, limit=5
    $region2: #{tpu_custom_call.1} parent=1 // loop_pre_header
      _
    $region3: #{tpu_custom_call.1} parent=1 // loop_header
      %s22 = sphi 0, %s26
      %p23 = scmp.ge.s32.totalorder %s22, 5
      %s32 = sphi 0, %s34
      %s35 = sphi 0, %s32
      %s36 = sphi 0, %s35
      %s52 = sphi 0, %s36
      %s58 = sphi 0, %s60
      %s61 = sphi 0, %s58
      %s62 = sphi 0, %s61
      %s78 = sphi 0, %s62
      %s82 = sphi 0, %s82
      %s84 = sphi 0, %s82
      %s85 = sphi 0, %s84
      %s99 = sphi 0, %s85
      %s103 = sphi 0, %s103
      %s105 = sphi 0, %s103
      %s106 = sphi 0, %s105
      %s120 = sphi 0, %s106
      %s124 = sphi 0, %s124
      %s126 = sphi 0, %s124
      %s127 = sphi 0, %s126
      %s141 = sphi 0, %s127
      %s145 = sphi 0, %s145
      %s147 = sphi 0, %s145
      %s148 = sphi 0, %s147
      %s162 = sphi 0, %s148
      %s166 = sphi 0, %s166
      %s168 = sphi 0, %s166
      %s169 = sphi 0, %s168
      %s183 = sphi 0, %s169
      %s187 = sphi 0, %s187
      %s189 = sphi 0, %s187
      %s190 = sphi 0, %s189
      %s204 = sphi 0, %s190
      %s208 = sphi 0, %s208
      %s210 = sphi 0, %s208
      %s211 = sphi 0, %s210
      %s225 = sphi 0, %s211
      %s229 = sphi 0, %s229
      %s231 = sphi 0, %s229
      %s232 = sphi 0, %s231
      %s246 = sphi 0, %s232
      %s250 = sphi 0, %s250
      %s252 = sphi 0, %s250
      %s253 = sphi 0, %s252
      %s267 = sphi 0, %s253
      %s273 = sphi 0, %s275
      %s276 = sphi 0, %s273
      %s277 = sphi 0, %s276
      %s293 = sphi 0, %s277
    $region4: #{tpu_custom_call.1} parent=1 // loop_header_branch
      %25 = sbr.rel (%p23) target = $region8
    $region5: #{tpu_custom_call.1} parent=1 // loop_body
      %s27 = ssub.s32 %s22, 1
      %s28 = ssub.s32 %s22, 2
      %s29 = sadd.s32 %s22, 1
      %s30 = ssub.s32 %s22, %s29
      %p31 = scmp.eq.s32.totalorder %s30, 0
      %s33 = sadd.s32 %s32, 1
      %s34 = scalar_select %p31, %s32, %s33
      %p37 = pneg %p31
      %p38 = scmp.eq.s32.totalorder %s22, 2
      %p39 = por %p37, %p38
      %p40 = scmp.ne.s32.totalorder %s32, %s35
      %p41 = scmp.eq.s32.totalorder %s22, 0
      %p42 = por %p40, %p41
      %p43 = scmp.ne.s32.totalorder %s32, %s35
      %p44 = scmp.eq.s32.totalorder %s27, 2
      %p45 = por %p43, %p44
      %p46 = scmp.ne.s32.totalorder %s35, %s36
      %p47 = scmp.eq.s32.totalorder %s27, 0
      %p48 = por %p46, %p47
      %p49 = scmp.ne.s32.totalorder %s35, %s36
      %p50 = scmp.eq.s32.totalorder %s28, 2
      %p51 = por %p49, %p50
      %p53 = scmp.ne.s32.totalorder %s36, %s52
      %p54 = scmp.eq.s32.totalorder %s28, 0
      %p55 = por %p53, %p54
      %s56 = ssub.s32 %s22, %s29
      %p57 = scmp.eq.s32.totalorder %s56, 0
      %s59 = sadd.s32 %s58, 1
      %s60 = scalar_select %p57, %s58, %s59
      %p63 = pneg %p57
      %p64 = scmp.eq.s32.totalorder %s22, 2
      %p65 = por %p63, %p64
      %p66 = scmp.ne.s32.totalorder %s58, %s61
      %p67 = scmp.eq.s32.totalorder %s22, 0
      %p68 = por %p66, %p67
      %p69 = scmp.ne.s32.totalorder %s58, %s61
      %p70 = scmp.eq.s32.totalorder %s27, 2
      %p71 = por %p69, %p70
      %p72 = scmp.ne.s32.totalorder %s61, %s62
      %p73 = scmp.eq.s32.totalorder %s27, 0
      %p74 = por %p72, %p73
      %p75 = scmp.ne.s32.totalorder %s61, %s62
      %p76 = scmp.eq.s32.totalorder %s28, 2
      %p77 = por %p75, %p76
      %p79 = scmp.ne.s32.totalorder %s62, %s78
      %p80 = scmp.eq.s32.totalorder %s28, 0
      %p81 = por %p79, %p80
      %s83 = sadd.s32 %s82, 1
      %p86 = scmp.eq.s32.totalorder %s22, 2
      %p87 = scmp.ne.s32.totalorder %s82, %s84
      %p88 = scmp.eq.s32.totalorder %s22, 0
      %p89 = por %p87, %p88
      %p90 = scmp.ne.s32.totalorder %s82, %s84
      %p91 = scmp.eq.s32.totalorder %s27, 2
      %p92 = por %p90, %p91
      %p93 = scmp.ne.s32.totalorder %s84, %s85
      %p94 = scmp.eq.s32.totalorder %s27, 0
      %p95 = por %p93, %p94
      %p96 = scmp.ne.s32.totalorder %s84, %s85
      %p97 = scmp.eq.s32.totalorder %s28, 2
      %p98 = por %p96, %p97
      %p100 = scmp.ne.s32.totalorder %s85, %s99
      %p101 = scmp.eq.s32.totalorder %s28, 0
      %p102 = por %p100, %p101
      %s104 = sadd.s32 %s103, 1
      %p107 = scmp.eq.s32.totalorder %s22, 2
      %p108 = scmp.ne.s32.totalorder %s103, %s105
      %p109 = scmp.eq.s32.totalorder %s22, 0
      %p110 = por %p108, %p109
      %p111 = scmp.ne.s32.totalorder %s103, %s105
      %p112 = scmp.eq.s32.totalorder %s27, 2
      %p113 = por %p111, %p112
      %p114 = scmp.ne.s32.totalorder %s105, %s106
      %p115 = scmp.eq.s32.totalorder %s27, 0
      %p116 = por %p114, %p115
      %p117 = scmp.ne.s32.totalorder %s105, %s106
      %p118 = scmp.eq.s32.totalorder %s28, 2
      %p119 = por %p117, %p118
      %p121 = scmp.ne.s32.totalorder %s106, %s120
      %p122 = scmp.eq.s32.totalorder %s28, 0
      %p123 = por %p121, %p122
      %s125 = sadd.s32 %s124, 1
      %p128 = scmp.eq.s32.totalorder %s22, 2
      %p129 = scmp.ne.s32.totalorder %s124, %s126
      %p130 = scmp.eq.s32.totalorder %s22, 0
      %p131 = por %p129, %p130
      %p132 = scmp.ne.s32.totalorder %s124, %s126
      %p133 = scmp.eq.s32.totalorder %s27, 2
      %p134 = por %p132, %p133
      %p135 = scmp.ne.s32.totalorder %s126, %s127
      %p136 = scmp.eq.s32.totalorder %s27, 0
      %p137 = por %p135, %p136
      %p138 = scmp.ne.s32.totalorder %s126, %s127
      %p139 = scmp.eq.s32.totalorder %s28, 2
      %p140 = por %p138, %p139
      %p142 = scmp.ne.s32.totalorder %s127, %s141
      %p143 = scmp.eq.s32.totalorder %s28, 0
      %p144 = por %p142, %p143
      %s146 = sadd.s32 %s145, 1
      %p149 = scmp.eq.s32.totalorder %s22, 2
      %p150 = scmp.ne.s32.totalorder %s145, %s147
      %p151 = scmp.eq.s32.totalorder %s22, 0
      %p152 = por %p150, %p151
      %p153 = scmp.ne.s32.totalorder %s145, %s147
      %p154 = scmp.eq.s32.totalorder %s27, 2
      %p155 = por %p153, %p154
      %p156 = scmp.ne.s32.totalorder %s147, %s148
      %p157 = scmp.eq.s32.totalorder %s27, 0
      %p158 = por %p156, %p157
      %p159 = scmp.ne.s32.totalorder %s147, %s148
      %p160 = scmp.eq.s32.totalorder %s28, 2
      %p161 = por %p159, %p160
      %p163 = scmp.ne.s32.totalorder %s148, %s162
      %p164 = scmp.eq.s32.totalorder %s28, 0
      %p165 = por %p163, %p164
      %s167 = sadd.s32 %s166, 1
      %p170 = scmp.eq.s32.totalorder %s22, 2
      %p171 = scmp.ne.s32.totalorder %s166, %s168
      %p172 = scmp.eq.s32.totalorder %s22, 0
      %p173 = por %p171, %p172
      %p174 = scmp.ne.s32.totalorder %s166, %s168
      %p175 = scmp.eq.s32.totalorder %s27, 2
      %p176 = por %p174, %p175
      %p177 = scmp.ne.s32.totalorder %s168, %s169
      %p178 = scmp.eq.s32.totalorder %s27, 0
      %p179 = por %p177, %p178
      %p180 = scmp.ne.s32.totalorder %s168, %s169
      %p181 = scmp.eq.s32.totalorder %s28, 2
      %p182 = por %p180, %p181
      %p184 = scmp.ne.s32.totalorder %s169, %s183
      %p185 = scmp.eq.s32.totalorder %s28, 0
      %p186 = por %p184, %p185
      %s188 = sadd.s32 %s187, 1
      %p191 = scmp.eq.s32.totalorder %s22, 2
      %p192 = scmp.ne.s32.totalorder %s187, %s189
      %p193 = scmp.eq.s32.totalorder %s22, 0
      %p194 = por %p192, %p193
      %p195 = scmp.ne.s32.totalorder %s187, %s189
      %p196 = scmp.eq.s32.totalorder %s27, 2
      %p197 = por %p195, %p196
      %p198 = scmp.ne.s32.totalorder %s189, %s190
      %p199 = scmp.eq.s32.totalorder %s27, 0
      %p200 = por %p198, %p199
      %p201 = scmp.ne.s32.totalorder %s189, %s190
      %p202 = scmp.eq.s32.totalorder %s28, 2
      %p203 = por %p201, %p202
      %p205 = scmp.ne.s32.totalorder %s190, %s204
      %p206 = scmp.eq.s32.totalorder %s28, 0
      %p207 = por %p205, %p206
      %s209 = sadd.s32 %s208, 1
      %p212 = scmp.eq.s32.totalorder %s22, 2
      %p213 = scmp.ne.s32.totalorder %s208, %s210
      %p214 = scmp.eq.s32.totalorder %s22, 0
      %p215 = por %p213, %p214
      %p216 = scmp.ne.s32.totalorder %s208, %s210
      %p217 = scmp.eq.s32.totalorder %s27, 2
      %p218 = por %p216, %p217
      %p219 = scmp.ne.s32.totalorder %s210, %s211
      %p220 = scmp.eq.s32.totalorder %s27, 0
      %p221 = por %p219, %p220
      %p222 = scmp.ne.s32.totalorder %s210, %s211
      %p223 = scmp.eq.s32.totalorder %s28, 2
      %p224 = por %p222, %p223
      %p226 = scmp.ne.s32.totalorder %s211, %s225
      %p227 = scmp.eq.s32.totalorder %s28, 0
      %p228 = por %p226, %p227
      %s230 = sadd.s32 %s229, 1
      %p233 = scmp.eq.s32.totalorder %s22, 2
      %p234 = scmp.ne.s32.totalorder %s229, %s231
      %p235 = scmp.eq.s32.totalorder %s22, 0
      %p236 = por %p234, %p235
      %p237 = scmp.ne.s32.totalorder %s229, %s231
      %p238 = scmp.eq.s32.totalorder %s27, 2
      %p239 = por %p237, %p238
      %p240 = scmp.ne.s32.totalorder %s231, %s232
      %p241 = scmp.eq.s32.totalorder %s27, 0
      %p242 = por %p240, %p241
      %p243 = scmp.ne.s32.totalorder %s231, %s232
      %p244 = scmp.eq.s32.totalorder %s28, 2
      %p245 = por %p243, %p244
      %p247 = scmp.ne.s32.totalorder %s232, %s246
      %p248 = scmp.eq.s32.totalorder %s28, 0
      %p249 = por %p247, %p248
      %s251 = sadd.s32 %s250, 1
      %p254 = scmp.eq.s32.totalorder %s22, 2
      %p255 = scmp.ne.s32.totalorder %s250, %s252
      %p256 = scmp.eq.s32.totalorder %s22, 0
      %p257 = por %p255, %p256
      %p258 = scmp.ne.s32.totalorder %s250, %s252
      %p259 = scmp.eq.s32.totalorder %s27, 2
      %p260 = por %p258, %p259
      %p261 = scmp.ne.s32.totalorder %s252, %s253
      %p262 = scmp.eq.s32.totalorder %s27, 0
      %p263 = por %p261, %p262
      %p264 = scmp.ne.s32.totalorder %s252, %s253
      %p265 = scmp.eq.s32.totalorder %s28, 2
      %p266 = por %p264, %p265
      %p268 = scmp.ne.s32.totalorder %s253, %s267
      %p269 = scmp.eq.s32.totalorder %s28, 0
      %p270 = por %p268, %p269
      %s271 = ssub.s32 %s22, %s29
      %p272 = scmp.eq.s32.totalorder %s271, 0
      %s274 = sadd.s32 %s273, 1
      %s275 = scalar_select %p272, %s273, %s274
      %p278 = pneg %p272
      %p279 = scmp.eq.s32.totalorder %s22, 2
      %p280 = por %p278, %p279
      %p281 = scmp.ne.s32.totalorder %s273, %s276
      %p282 = scmp.eq.s32.totalorder %s22, 0
      %p283 = por %p281, %p282
      %p284 = scmp.ne.s32.totalorder %s273, %s276
      %p285 = scmp.eq.s32.totalorder %s27, 2
      %p286 = por %p284, %p285
      %p287 = scmp.ne.s32.totalorder %s276, %s277
      %p288 = scmp.eq.s32.totalorder %s27, 0
      %p289 = por %p287, %p288
      %p290 = scmp.ne.s32.totalorder %s276, %s277
      %p291 = scmp.eq.s32.totalorder %s28, 2
      %p292 = por %p290, %p291
      %p294 = scmp.ne.s32.totalorder %s277, %s293
      %p295 = scmp.eq.s32.totalorder %s28, 0
      %p296 = por %p294, %p295
      %p297 = scmp.le.s32.totalorder 1, %s22
      %p298 = scmp.lt.s32.totalorder %s22, 4
      %p299 = pnand %p297, %p298
      %p300 = pneg %p299
      // Predicated region
      $region9: #{tpu_custom_call.1} parent=5 // pred_check
        _
      $region10: #{tpu_custom_call.1} parent=5 // pred_check_branch
        %302 = sbr.rel (%p299) target = $region12
      $region11: #{tpu_custom_call.1} parent=5 // pred_region
        %s303 = ssub.s32 %s22, 1
        // Predicated region
        $region13: #{tpu_custom_call.1} parent=11 // pred_check
          %p304 = pneg %p95
        $region14: #{tpu_custom_call.1} parent=11 // pred_check_branch
          %306 = sbr.rel (%p304) target = $region16
        $region15: #{tpu_custom_call.1} parent=11 // pred_region
          _
        $region16: #{tpu_custom_call.1} parent=11 // pred_fallthru
          _
        // Predicated region
        $region17: #{tpu_custom_call.1} parent=11 // pred_check
          %p307 = pneg %p116
        $region18: #{tpu_custom_call.1} parent=11 // pred_check_branch
          %309 = sbr.rel (%p307) target = $region20
        $region19: #{tpu_custom_call.1} parent=11 // pred_region
          _
        $region20: #{tpu_custom_call.1} parent=11 // pred_fallthru
          _
        // Predicated region
        $region21: #{tpu_custom_call.1} parent=11 // pred_check
          %p310 = pneg %p137
        $region22: #{tpu_custom_call.1} parent=11 // pred_check_branch
          %312 = sbr.rel (%p310) target = $region24
        $region23: #{tpu_custom_call.1} parent=11 // pred_region
          _
        $region24: #{tpu_custom_call.1} parent=11 // pred_fallthru
          _
        // Predicated region
        $region25: #{tpu_custom_call.1} parent=11 // pred_check
          %p313 = pneg %p158
        $region26: #{tpu_custom_call.1} parent=11 // pred_check_branch
          %315 = sbr.rel (%p313) target = $region28
        $region27: #{tpu_custom_call.1} parent=11 // pred_region
          _
        $region28: #{tpu_custom_call.1} parent=11 // pred_fallthru
          _
        // Predicated region
        $region29: #{tpu_custom_call.1} parent=11 // pred_check
          %p316 = pneg %p179
        $region30: #{tpu_custom_call.1} parent=11 // pred_check_branch
          %318 = sbr.rel (%p316) target = $region32
        $region31: #{tpu_custom_call.1} parent=11 // pred_region
          _
        $region32: #{tpu_custom_call.1} parent=11 // pred_fallthru
          _
        // Predicated region
        $region33: #{tpu_custom_call.1} parent=11 // pred_check
          %p319 = pneg %p200
        $region34: #{tpu_custom_call.1} parent=11 // pred_check_branch
          %321 = sbr.rel (%p319) target = $region36
        $region35: #{tpu_custom_call.1} parent=11 // pred_region
          _
        $region36: #{tpu_custom_call.1} parent=11 // pred_fallthru
          _
        // Predicated region
        $region37: #{tpu_custom_call.1} parent=11 // pred_check
          %p322 = pneg %p221
        $region38: #{tpu_custom_call.1} parent=11 // pred_check_branch
          %324 = sbr.rel (%p322) target = $region40
        $region39: #{tpu_custom_call.1} parent=11 // pred_region
          _
        $region40: #{tpu_custom_call.1} parent=11 // pred_fallthru
          _
        // Predicated region
        $region41: #{tpu_custom_call.1} parent=11 // pred_check
          %p325 = pneg %p242
        $region42: #{tpu_custom_call.1} parent=11 // pred_check_branch
          %327 = sbr.rel (%p325) target = $region44
        $region43: #{tpu_custom_call.1} parent=11 // pred_region
          _
        $region44: #{tpu_custom_call.1} parent=11 // pred_fallthru
          _
        // Predicated region
        $region45: #{tpu_custom_call.1} parent=11 // pred_check
          %p328 = pneg %p263
        $region46: #{tpu_custom_call.1} parent=11 // pred_check_branch
          %330 = sbr.rel (%p328) target = $region48
        $region47: #{tpu_custom_call.1} parent=11 // pred_region
          _
        $region48: #{tpu_custom_call.1} parent=11 // pred_fallthru
          _
      $region12: #{tpu_custom_call.1} parent=5 // pred_fallthru
        _
      %p331 = scmp.lt.s32.totalorder %s22, 3
      // Predicated region
      $region49: #{tpu_custom_call.1} parent=5 // pred_check
        %p332 = pneg %p331
      $region50: #{tpu_custom_call.1} parent=5 // pred_check_branch
        %334 = sbr.rel (%p332) target = $region52
      $region51: #{tpu_custom_call.1} parent=5 // pred_region
        // Predicated region
        $region53: #{tpu_custom_call.1} parent=51 // pred_check
          %p335 = pneg %p42
        $region54: #{tpu_custom_call.1} parent=51 // pred_check_branch
          %337 = sbr.rel (%p335) target = $region56
        $region55: #{tpu_custom_call.1} parent=51 // pred_region
          %p338 = scmp.lt.s32.totalorder %s22, 2
          %s339 = scalar_select %p338, %s22, 2
          %s340 = smul.addr %s339, 8
          %s341 = scalar_lea.vmem %s0, %s340
        $region56: #{tpu_custom_call.1} parent=51 // pred_fallthru
          _
        // Predicated region
        $region57: #{tpu_custom_call.1} parent=51 // pred_check
          %p342 = pneg %p68
        $region58: #{tpu_custom_call.1} parent=51 // pred_check_branch
          %344 = sbr.rel (%p342) target = $region60
        $region59: #{tpu_custom_call.1} parent=51 // pred_region
          %s345 = sand.u32 %s58, 1
          %s346 = sand.u32 %s58, 1
          %s347 = smul.addr %s346, 32
          %s348 = scalar_lea.vmem [#allocation3], %s347
          %s349 = smul.addr %s22, 8
          %s350 = scalar_lea.vmem %s1, %s349
          // Predicated region
          $region61: #{tpu_custom_call.1} parent=59 // pred_check
            _
          $region62: #{tpu_custom_call.1} parent=59 // pred_check_branch
            %352 = sbr.rel (0) target = $region64
          $region63: #{tpu_custom_call.1} parent=59 // pred_region
            // Predicated region
            $region65: #{tpu_custom_call.1} parent=63 // pred_check
              _
            $region66: #{tpu_custom_call.1} parent=63 // pred_check_branch
              %354 = sbr.rel (0) target = $region68
            $region67: #{tpu_custom_call.1} parent=63 // pred_region
              // Predicated region
              $region80: #{tpu_custom_call.1} parent=67 // pred_check
                _
              $region81: #{tpu_custom_call.1} parent=67 // pred_check_branch
                %376 = sbr.rel (0) target = $region83
              $region82: #{tpu_custom_call.1} parent=67 // pred_region
                loop: start=0, step=1, limit=1
                $region84: #{tpu_custom_call.1} parent=82 // loop_pre_header
                  _
                $region85: #{tpu_custom_call.1} parent=82 // loop_header
                  %s378 = sphi 0, %s382
                  %p379 = scmp.ge.s32.totalorder %s378, 1
                  %s383 = sphi %s350, %s350
                  %s384 = sphi %s348, %s348
                $region86: #{tpu_custom_call.1} parent=82 // loop_header_branch
                  %381 = sbr.rel (%p379) target = $region90
                $region87: #{tpu_custom_call.1} parent=82 // loop_body
                  %v385 = vld [vmem:[%s383] sm:$0xff]
                  %386 = vst [vmem:[%s384] sm:$0xff] %v385
                  %v387 = vld [vmem:[%s383 + $0x18] sm:$0xff]
                  %388 = vst [vmem:[%s384 + $0x8] sm:$0xff] %v387
                  %v389 = vld [vmem:[%s383 + $0x30] sm:$0xff]
                  %390 = vst [vmem:[%s384 + $0x10] sm:$0xff] %v389
                  %v391 = vld [vmem:[%s383 + $0x48] sm:$0xff]
                  %392 = vst [vmem:[%s384 + $0x18] sm:$0xff] %v391
                $region88: #{tpu_custom_call.1} parent=82 // loop_footer
                  %s382 = sadd.s32 1, %s378
                $region89: #{tpu_custom_call.1} parent=82 // loop_footer_branch
                  %377 = sbr.rel target = $region85
                $region90: #{tpu_custom_call.1} parent=82 // loop_exit
                  _
              $region83: #{tpu_custom_call.1} parent=67 // pred_fallthru
                _
              // Predicated region
              $region91: #{tpu_custom_call.1} parent=67 // pred_check
                _
              $region92: #{tpu_custom_call.1} parent=67 // pred_check_branch
                %394 = sbr.rel target = $region94
              $region93: #{tpu_custom_call.1} parent=67 // pred_region
                _
              $region94: #{tpu_custom_call.1} parent=67 // pred_fallthru
                _
            $region68: #{tpu_custom_call.1} parent=63 // pred_fallthru
              _
            // Predicated region
            $region69: #{tpu_custom_call.1} parent=63 // pred_check
              _
            $region70: #{tpu_custom_call.1} parent=63 // pred_check_branch
              %356 = sbr.rel target = $region72
            $region71: #{tpu_custom_call.1} parent=63 // pred_region
              %s358 = ssub.s32 256, 1
              loop: start=0, step=1, limit=1
              $region73: #{tpu_custom_call.1} parent=71 // loop_pre_header
                _
              $region74: #{tpu_custom_call.1} parent=71 // loop_header
                %s360 = sphi 0, %s364
                %p361 = scmp.ge.s32.totalorder %s360, 1
                %s365 = sphi %s350, %s350
                %s366 = sphi %s348, %s348
              $region75: #{tpu_custom_call.1} parent=71 // loop_header_branch
                %363 = sbr.rel (%p361) target = $region79
              $region76: #{tpu_custom_call.1} parent=71 // loop_body
                %v367 = vld [vmem:[%s365] sm:%s358]
                %368 = vst [vmem:[%s366] sm:%s358] %v367
                %v369 = vld [vmem:[%s365 + $0x18] sm:%s358]
                %370 = vst [vmem:[%s366 + $0x8] sm:%s358] %v369
                %v371 = vld [vmem:[%s365 + $0x30] sm:%s358]
                %372 = vst [vmem:[%s366 + $0x10] sm:%s358] %v371
                %v373 = vld [vmem:[%s365 + $0x48] sm:%s358]
                %374 = vst [vmem:[%s366 + $0x18] sm:%s358] %v373
              $region77: #{tpu_custom_call.1} parent=71 // loop_footer
                %s364 = sadd.s32 1, %s360
              $region78: #{tpu_custom_call.1} parent=71 // loop_footer_branch
                %359 = sbr.rel target = $region74
              $region79: #{tpu_custom_call.1} parent=71 // loop_exit
                _
            $region72: #{tpu_custom_call.1} parent=63 // pred_fallthru
              _
          $region64: #{tpu_custom_call.1} parent=59 // pred_fallthru
            _
          %395 = vnop
        $region60: #{tpu_custom_call.1} parent=51 // pred_fallthru
          _
      $region52: #{tpu_custom_call.1} parent=5 // pred_fallthru
        _
      %p396 = scmp.le.s32.totalorder 1, %s22
      %p397 = scmp.lt.s32.totalorder %s22, 4
      %p398 = pnand %p396, %p397
      %p399 = pneg %p398
      // Predicated region
      $region95: #{tpu_custom_call.1} parent=5 // pred_check
        _
      $region96: #{tpu_custom_call.1} parent=5 // pred_check_branch
        %401 = sbr.rel (%p398) target = $region98
      $region97: #{tpu_custom_call.1} parent=5 // pred_region
        %s402 = ssub.s32 %s22, 1
        %s403 = sand.u32 %s61, 1
        %s404 = sand.u32 %s61, 1
        %s405 = smul.addr %s404, 32
        %s406 = scalar_lea.vmem [#allocation3], %s405
        // Predicated region
        $region99: #{tpu_custom_call.1} parent=97 // pred_check
          %p407 = pneg %p74
        $region100: #{tpu_custom_call.1} parent=97 // pred_check_branch
          %409 = sbr.rel (%p407) target = $region102
        $region101: #{tpu_custom_call.1} parent=97 // pred_region
          _
        $region102: #{tpu_custom_call.1} parent=97 // pred_fallthru
          _
        %p410 = scmp.lt.s32.totalorder %s27, 2
        %s411 = scalar_select %p410, %s27, 2
        %s412 = smul.addr %s411, 8
        %s413 = scalar_lea.vmem %s0, %s412
        %p414 = pneg %p48
        %p415 = pneg %p45
        %s416 = sand.u32 %s61, 1
        %s417 = sand.u32 %s61, 1
        %s418 = smul.addr %s417, 32
        %s419 = scalar_lea.vmem [#allocation3], %s418
        %p420 = pneg %p74
        %p421 = pneg %p71
        %p422 = pneg %p95
        %p423 = pneg %p92
        %p424 = pneg %p116
        %p425 = pneg %p113
        %p426 = pneg %p137
        %p427 = pneg %p134
        %p428 = pneg %p158
        %p429 = pneg %p155
        %p430 = pneg %p179
        %p431 = pneg %p176
        %p432 = pneg %p200
        %p433 = pneg %p197
        %p434 = pneg %p221
        %p435 = pneg %p218
        %p436 = pneg %p242
        %p437 = pneg %p239
        %p438 = pneg %p263
        %p439 = pneg %p260
        %p440 = pneg %p289
        %p441 = pneg %p286
        %s442 = sand.u32 %s276, 1
        %s443 = scalar_lea.sflag [#allocation5], %s442
        %s444 = sand.u32 %s276, 1
        %s445 = scalar_lea.vmem [#allocation4], %s444
        %p446 = scmp.lt.s32.totalorder %s27, 2
        %s447 = scalar_select %p446, %s27, 2
        %s448 = smul.addr %s447, 8
        %s449 = scalar_lea.vmem %s0, %s448
        %v450 = vld [vmem:[%s449] sm:$0xff]
        %v451 = vld [vmem:[%s406] sm:$0xff]
        %v452 = vld [vmem:[%s406 + $0x8] sm:$0xff]
        %v453 = vld [vmem:[%s406 + $0x10] sm:$0xff]
        %v454 = vld [vmem:[%s406 + $0x18] sm:$0xff]
        %v455 = vld [vmem:[%s2] sm:$0xff]
        %v456 = vld [vmem:[%s2 + $0x8] sm:$0xff]
        %v457 = vld [vmem:[%s2 + $0x10] sm:$0xff]
        %v458 = vld [vmem:[%s2 + $0x18] sm:$0xff]
        %460 = vset.pattern.permute.xlu0 0
        %461 = vperm.xlu0 %460, %v455
        %v462 = vpop.permute.xlu0 %461
        %465 = vset.pattern.permute.xlu0 0
        %466 = vperm.xlu0 %465, %v456
        %v467 = vpop.permute.xlu0 %466
        %470 = vset.pattern.permute.xlu0 0
        %471 = vperm.xlu0 %470, %v457
        %v472 = vpop.permute.xlu0 %471
        %475 = vset.pattern.permute.xlu0 0
        %476 = vperm.xlu0 %475, %v458
        %v477 = vpop.permute.xlu0 %476
        %v479 = vperm.slane %v450, 0
        %v480 = vmul.f32 %v462, %v479
        %v481 = vmul.f32 %v467, %v479
        %v482 = vmul.f32 %v472, %v479
        %v483 = vmul.f32 %v477, %v479
        %484 = vset.pattern.permute.xlu0 1
        %485 = vperm.xlu0 %484, %v455
        %v486 = vpop.permute.xlu0 %485
        %488 = vset.pattern.permute.xlu0 1
        %489 = vperm.xlu0 %488, %v456
        %v490 = vpop.permute.xlu0 %489
        %492 = vset.pattern.permute.xlu0 1
        %493 = vperm.xlu0 %492, %v457
        %v494 = vpop.permute.xlu0 %493
        %496 = vset.pattern.permute.xlu0 1
        %497 = vperm.xlu0 %496, %v458
        %v498 = vpop.permute.xlu0 %497
        %v500 = vperm.slane %v450, 1
        %v501 = vmul.f32 %v486, %v500
        %v502 = vmul.f32 %v490, %v500
        %v503 = vmul.f32 %v494, %v500
        %v504 = vmul.f32 %v498, %v500
        %v505 = vadd.f32 %v480, %v501
        %v506 = vadd.f32 %v481, %v502
        %v507 = vadd.f32 %v482, %v503
        %v508 = vadd.f32 %v483, %v504
        %509 = vset.pattern.permute.xlu0 2
        %510 = vperm.xlu0 %509, %v455
        %v511 = vpop.permute.xlu0 %510
        %513 = vset.pattern.permute.xlu0 2
        %514 = vperm.xlu0 %513, %v456
        %v515 = vpop.permute.xlu0 %514
        %517 = vset.pattern.permute.xlu0 2
        %518 = vperm.xlu0 %517, %v457
        %v519 = vpop.permute.xlu0 %518
        %521 = vset.pattern.permute.xlu0 2
        %522 = vperm.xlu0 %521, %v458
        %v523 = vpop.permute.xlu0 %522
        %v525 = vperm.slane %v450, 2
        %v526 = vmul.f32 %v511, %v525
        %v527 = vmul.f32 %v515, %v525
        %v528 = vmul.f32 %v519, %v525
        %v529 = vmul.f32 %v523, %v525
        %v530 = vadd.f32 %v505, %v526
        %v531 = vadd.f32 %v506, %v527
        %v532 = vadd.f32 %v507, %v528
        %v533 = vadd.f32 %v508, %v529
        %v534 = vand.u32 2147483647, %v530
        %vm535 = vcmp.le.f32.partialorder %v534, 0.7853982
        %vm536 = vcmp.lt.s32.totalorder %v530, 0
        %v537 = vand.u32 %v530, 2139095040
        %v538 = vshrl.u32 %v537, 23
        %v539 = vsub.s32 %v538, 127
        %v540 = vand.u32 2147483647, %v530
        %v541 = vand.u32 %v540, 8388607
        %v542 = vor.u32 %v541, 8388608
        %v543 = vsub.s32 0, %v542
        %v544 = vadd.s32 %v539, 1
        %vm545 = vcmp.gt.s32.totalorder %v544, 0
        %v546 = vsel %vm545, %v544, 0
        %v547 = vshrl.u32 %v546, 5
        %v548 = vand.u32 %v546, 31
        %v549 = vsub.s32 32, %v548
        %v550 = vshrl.u32 683565275, %v549
        %v551 = vshll.u32 683565275, %v548
        %v552 = vshrl.u32 2475754826, %v549
        %v553 = vor.u32 %v551, %v552
        %v554 = vshll.u32 2475754826, %v548
        %v555 = vshrl.u32 2131351028, %v549
        %v556 = vor.u32 %v554, %v555
        %v557 = vshll.u32 2131351028, %v548
        %v558 = vshrl.u32 2102212464, %v549
        %v559 = vor.u32 %v557, %v558
        %v560 = vshll.u32 2102212464, %v548
        %v561 = vshrl.u32 920167782, %v549
        %v562 = vor.u32 %v560, %v561
        %v563 = vshll.u32 920167782, %v548
        %v564 = vshrl.u32 1326507024, %v549
        %v565 = vor.u32 %v563, %v564
        %vm566 = vcmp.lt.s32.totalorder %v547, 1
        %vm567 = vcmp.lt.s32.totalorder %v547, 2
        %vm568 = vcmp.lt.s32.totalorder %v547, 3
        %vm569 = vcmp.lt.s32.totalorder %v547, 4
        %v570 = vsel %vm566, %v550, %v553
        %v571 = vsel %vm569, %v559, 2102212464
        %v572 = vsel %vm568, %v556, %v571
        %v573 = vsel %vm567, %v570, %v572
        %v574 = vsel %vm566, %v553, %v556
        %v575 = vsel %vm569, %v562, 920167782
        %v576 = vsel %vm568, %v559, %v575
        %v577 = vsel %vm567, %v574, %v576
        %v578 = vsel %vm566, %v556, %v559
        %v579 = vsel %vm569, %v565, 1326507024
        %v580 = vsel %vm568, %v562, %v579
        %v581 = vsel %vm567, %v578, %v580
        %v582 = vshll.u32 %v542, 8
        %v583 = vand.u32 %v582, 65535
        %v584 = vshrl.u32 %v582, 16
        %v585 = vand.u32 %v581, 65535
        %v586 = vshrl.u32 %v581, 16
        %v587 = vmul.u32 %v583, %v585
        %v588 = vmul.u32 %v583, %v586
        %v589 = vmul.u32 %v584, %v585
        %v590 = vmul.u32 %v584, %v586
        %v591 = vshll.u32 %v588, 16
        %v592 = vshrl.u32 %v588, 16
        %v593 = vshll.u32 %v589, 16
        %v594 = vshrl.u32 %v589, 16
        %vm595 = vc.u32 %v587, %v591
        %v596 = vsel %vm595, 1, 0
        %v597 = vadd.s32 %v587, %v591
        %v598 = vadd.s32 %v590, %v596
        %vm599 = vc.u32 %v597, %v593
        %v600 = vsel %vm599, 1, 0
        %v601 = vadd.s32 %v597, %v593
        %v602 = vadd.s32 %v598, %v600
        %v603 = vadd.s32 %v602, %v592
        %v604 = vadd.s32 %v603, %v594
        %v605 = vand.u32 %v582, 65535
        %v606 = vshrl.u32 %v582, 16
        %v607 = vand.u32 %v577, 65535
        %v608 = vshrl.u32 %v577, 16
        %v609 = vmul.u32 %v605, %v607
        %v610 = vmul.u32 %v605, %v608
        %v611 = vmul.u32 %v606, %v607
        %v612 = vmul.u32 %v606, %v608
        %v613 = vshll.u32 %v610, 16
        %v614 = vshrl.u32 %v610, 16
        %v615 = vshll.u32 %v611, 16
        %v616 = vshrl.u32 %v611, 16
        %vm617 = vc.u32 %v609, %v613
        %v618 = vsel %vm617, 1, 0
        %v619 = vadd.s32 %v609, %v613
        %v620 = vadd.s32 %v612, %v618
        %vm621 = vc.u32 %v619, %v615
        %v622 = vsel %vm621, 1, 0
        %v623 = vadd.s32 %v619, %v615
        %v624 = vadd.s32 %v620, %v622
        %v625 = vadd.s32 %v624, %v614
        %v626 = vadd.s32 %v625, %v616
        %v627 = vmul.u32 %v582, %v573
        %v628 = vadd.s32 %v604, %v623
        %vm629 = vc.u32 %v604, %v623
        %v630 = vadd.s32 %v626, 1
        %v631 = vsel %vm629, %v630, %v626
        %v632 = vadd.s32 %v627, %v631
        %v633 = vadd.s32 %v632, 536870912
        %v634 = vshrl.u32 %v633, 30
        %v635 = vshll.u32 %v634, 30
        %v636 = vsub.s32 %v632, %v635
        %vm637 = vcmp.lt.s32.totalorder %v636, 0
        %v638 = vsub.s32 0, %v636
        %v639 = vsel %vm637, %v638, %v636
        %v640 = vclz %v639
        %v641 = vsub.s32 %v640, 2
        %vm642 = vcmp.gt.s32.totalorder 0, %v641
        %v643 = vsel %vm642, 0, %v641
        %v644 = vsub.s32 32, %v643
        %v645 = vshll.u32 %v636, %v643
        %v646 = vshrl.u32 %v628, %v644
        %v647 = vor.u32 %v645, %v646
        %v648 = vsub.s32 4294967266, %v643
        %v649 = vadd.s32 %v648, 127
        %v650 = vshll.u32 %v649, 23
        %v651 = vor.u32 4788187, %v650
        %v652 = vand.u32 2147483647, %v651
        %v654 = vcvt.s32.f32 %v647
        %v655 = vmul.f32 %v654, %v652
        %v656 = vxor.u32 %v655, 2147483648
        %v657 = vsel %vm536, %v656, %v655
        %v658 = vsub.s32 4, %v634
        %v659 = vsel %vm536, %v658, %v634
        %v660 = vsel %vm535, %v530, %v657
        %v661 = vsel %vm535, 0, %v659
        %v662 = vmul.f32 %v660, %v660
        %v663 = vmul.f32 %v662, -0.001358992
        %v664 = vadd.f32 %v663, 0.041655596
        %v665 = vmul.f32 %v662, %v664
        %v666 = vadd.f32 %v665, -0.4999988
        %v667 = vmul.f32 %v662, %v666
        %v668 = vadd.f32 1.0, %v667
        %v669 = vmul.f32 %v660, %v660
        %v670 = vmul.f32 %v669, -0.00019511016
        %v671 = vadd.f32 %v670, 0.008332121
        %v672 = vmul.f32 %v669, %v671
        %v673 = vadd.f32 %v672, -0.16666654
        %v674 = vmul.f32 %v669, %v673
        %v675 = vadd.f32 %v674, 1.0
        %v676 = vmul.f32 %v675, %v660
        %vm677 = vweird.f32 %v530
        %v678 = vadd.s32 %v661, 3
        %v679 = vand.u32 %v678, 3
        %vm680 = vcmp.lt.s32.totalorder %v679, 2
        %vm681 = vcmp.eq.s32.totalorder %v679, 0
        %v682 = vxor.u32 %v676, 2147483648
        %v683 = vsel %vm681, %v668, %v682
        %vm684 = vcmp.eq.s32.totalorder %v679, 2
        %v685 = vxor.u32 %v668, 2147483648
        %v686 = vsel %vm684, %v685, %v676
        %v687 = vsel %vm680, %v683, %v686
        %v688 = vsel %vm677, nan, %v687
        %v689 = vand.u32 2147483647, %v531
        %vm690 = vcmp.le.f32.partialorder %v689, 0.7853982
        %vm691 = vcmp.lt.s32.totalorder %v531, 0
        %v692 = vand.u32 %v531, 2139095040
        %v693 = vshrl.u32 %v692, 23
        %v694 = vsub.s32 %v693, 127
        %v695 = vand.u32 2147483647, %v531
        %v696 = vand.u32 %v695, 8388607
        %v697 = vor.u32 %v696, 8388608
        %v698 = vsub.s32 0, %v697
        %v699 = vadd.s32 %v694, 1
        %vm700 = vcmp.gt.s32.totalorder %v699, 0
        %v701 = vsel %vm700, %v699, 0
        %v702 = vshrl.u32 %v701, 5
        %v703 = vand.u32 %v701, 31
        %v704 = vsub.s32 32, %v703
        %v705 = vshrl.u32 683565275, %v704
        %v706 = vshll.u32 683565275, %v703
        %v707 = vshrl.u32 2475754826, %v704
        %v708 = vor.u32 %v706, %v707
        %v709 = vshll.u32 2475754826, %v703
        %v710 = vshrl.u32 2131351028, %v704
        %v711 = vor.u32 %v709, %v710
        %v712 = vshll.u32 2131351028, %v703
        %v713 = vshrl.u32 2102212464, %v704
        %v714 = vor.u32 %v712, %v713
        %v715 = vshll.u32 2102212464, %v703
        %v716 = vshrl.u32 920167782, %v704
        %v717 = vor.u32 %v715, %v716
        %v718 = vshll.u32 920167782, %v703
        %v719 = vshrl.u32 1326507024, %v704
        %v720 = vor.u32 %v718, %v719
        %vm721 = vcmp.lt.s32.totalorder %v702, 1
        %vm722 = vcmp.lt.s32.totalorder %v702, 2
        %vm723 = vcmp.lt.s32.totalorder %v702, 3
        %vm724 = vcmp.lt.s32.totalorder %v702, 4
        %v725 = vsel %vm721, %v705, %v708
        %v726 = vsel %vm724, %v714, 2102212464
        %v727 = vsel %vm723, %v711, %v726
        %v728 = vsel %vm722, %v725, %v727
        %v729 = vsel %vm721, %v708, %v711
        %v730 = vsel %vm724, %v717, 920167782
        %v731 = vsel %vm723, %v714, %v730
        %v732 = vsel %vm722, %v729, %v731
        %v733 = vsel %vm721, %v711, %v714
        %v734 = vsel %vm724, %v720, 1326507024
        %v735 = vsel %vm723, %v717, %v734
        %v736 = vsel %vm722, %v733, %v735
        %v737 = vshll.u32 %v697, 8
        %v738 = vand.u32 %v737, 65535
        %v739 = vshrl.u32 %v737, 16
        %v740 = vand.u32 %v736, 65535
        %v741 = vshrl.u32 %v736, 16
        %v742 = vmul.u32 %v738, %v740
        %v743 = vmul.u32 %v738, %v741
        %v744 = vmul.u32 %v739, %v740
        %v745 = vmul.u32 %v739, %v741
        %v746 = vshll.u32 %v743, 16
        %v747 = vshrl.u32 %v743, 16
        %v748 = vshll.u32 %v744, 16
        %v749 = vshrl.u32 %v744, 16
        %vm750 = vc.u32 %v742, %v746
        %v751 = vsel %vm750, 1, 0
        %v752 = vadd.s32 %v742, %v746
        %v753 = vadd.s32 %v745, %v751
        %vm754 = vc.u32 %v752, %v748
        %v755 = vsel %vm754, 1, 0
        %v756 = vadd.s32 %v752, %v748
        %v757 = vadd.s32 %v753, %v755
        %v758 = vadd.s32 %v757, %v747
        %v759 = vadd.s32 %v758, %v749
        %v760 = vand.u32 %v737, 65535
        %v761 = vshrl.u32 %v737, 16
        %v762 = vand.u32 %v732, 65535
        %v763 = vshrl.u32 %v732, 16
        %v764 = vmul.u32 %v760, %v762
        %v765 = vmul.u32 %v760, %v763
        %v766 = vmul.u32 %v761, %v762
        %v767 = vmul.u32 %v761, %v763
        %v768 = vshll.u32 %v765, 16
        %v769 = vshrl.u32 %v765, 16
        %v770 = vshll.u32 %v766, 16
        %v771 = vshrl.u32 %v766, 16
        %vm772 = vc.u32 %v764, %v768
        %v773 = vsel %vm772, 1, 0
        %v774 = vadd.s32 %v764, %v768
        %v775 = vadd.s32 %v767, %v773
        %vm776 = vc.u32 %v774, %v770
        %v777 = vsel %vm776, 1, 0
        %v778 = vadd.s32 %v774, %v770
        %v779 = vadd.s32 %v775, %v777
        %v780 = vadd.s32 %v779, %v769
        %v781 = vadd.s32 %v780, %v771
        %v782 = vmul.u32 %v737, %v728
        %v783 = vadd.s32 %v759, %v778
        %vm784 = vc.u32 %v759, %v778
        %v785 = vadd.s32 %v781, 1
        %v786 = vsel %vm784, %v785, %v781
        %v787 = vadd.s32 %v782, %v786
        %v788 = vadd.s32 %v787, 536870912
        %v789 = vshrl.u32 %v788, 30
        %v790 = vshll.u32 %v789, 30
        %v791 = vsub.s32 %v787, %v790
        %vm792 = vcmp.lt.s32.totalorder %v791, 0
        %v793 = vsub.s32 0, %v791
        %v794 = vsel %vm792, %v793, %v791
        %v795 = vclz %v794
        %v796 = vsub.s32 %v795, 2
        %vm797 = vcmp.gt.s32.totalorder 0, %v796
        %v798 = vsel %vm797, 0, %v796
        %v799 = vsub.s32 32, %v798
        %v800 = vshll.u32 %v791, %v798
        %v801 = vshrl.u32 %v783, %v799
        %v802 = vor.u32 %v800, %v801
        %v803 = vsub.s32 4294967266, %v798
        %v804 = vadd.s32 %v803, 127
        %v805 = vshll.u32 %v804, 23
        %v806 = vor.u32 4788187, %v805
        %v807 = vand.u32 2147483647, %v806
        %v809 = vcvt.s32.f32 %v802
        %v810 = vmul.f32 %v809, %v807
        %v811 = vxor.u32 %v810, 2147483648
        %v812 = vsel %vm691, %v811, %v810
        %v813 = vsub.s32 4, %v789
        %v814 = vsel %vm691, %v813, %v789
        %v815 = vsel %vm690, %v531, %v812
        %v816 = vsel %vm690, 0, %v814
        %v817 = vmul.f32 %v815, %v815
        %v818 = vmul.f32 %v817, -0.001358992
        %v819 = vadd.f32 %v818, 0.041655596
        %v820 = vmul.f32 %v817, %v819
        %v821 = vadd.f32 %v820, -0.4999988
        %v822 = vmul.f32 %v817, %v821
        %v823 = vadd.f32 1.0, %v822
        %v824 = vmul.f32 %v815, %v815
        %v825 = vmul.f32 %v824, -0.00019511016
        %v826 = vadd.f32 %v825, 0.008332121
        %v827 = vmul.f32 %v824, %v826
        %v828 = vadd.f32 %v827, -0.16666654
        %v829 = vmul.f32 %v824, %v828
        %v830 = vadd.f32 %v829, 1.0
        %v831 = vmul.f32 %v830, %v815
        %vm832 = vweird.f32 %v531
        %v833 = vadd.s32 %v816, 3
        %v834 = vand.u32 %v833, 3
        %vm835 = vcmp.lt.s32.totalorder %v834, 2
        %vm836 = vcmp.eq.s32.totalorder %v834, 0
        %v837 = vxor.u32 %v831, 2147483648
        %v838 = vsel %vm836, %v823, %v837
        %vm839 = vcmp.eq.s32.totalorder %v834, 2
        %v840 = vxor.u32 %v823, 2147483648
        %v841 = vsel %vm839, %v840, %v831
        %v842 = vsel %vm835, %v838, %v841
        %v843 = vsel %vm832, nan, %v842
        %v844 = vand.u32 2147483647, %v532
        %vm845 = vcmp.le.f32.partialorder %v844, 0.7853982
        %vm846 = vcmp.lt.s32.totalorder %v532, 0
        %v847 = vand.u32 %v532, 2139095040
        %v848 = vshrl.u32 %v847, 23
        %v849 = vsub.s32 %v848, 127
        %v850 = vand.u32 2147483647, %v532
        %v851 = vand.u32 %v850, 8388607
        %v852 = vor.u32 %v851, 8388608
        %v853 = vsub.s32 0, %v852
        %v854 = vadd.s32 %v849, 1
        %vm855 = vcmp.gt.s32.totalorder %v854, 0
        %v856 = vsel %vm855, %v854, 0
        %v857 = vshrl.u32 %v856, 5
        %v858 = vand.u32 %v856, 31
        %v859 = vsub.s32 32, %v858
        %v860 = vshrl.u32 683565275, %v859
        %v861 = vshll.u32 683565275, %v858
        %v862 = vshrl.u32 2475754826, %v859
        %v863 = vor.u32 %v861, %v862
        %v864 = vshll.u32 2475754826, %v858
        %v865 = vshrl.u32 2131351028, %v859
        %v866 = vor.u32 %v864, %v865
        %v867 = vshll.u32 2131351028, %v858
        %v868 = vshrl.u32 2102212464, %v859
        %v869 = vor.u32 %v867, %v868
        %v870 = vshll.u32 2102212464, %v858
        %v871 = vshrl.u32 920167782, %v859
        %v872 = vor.u32 %v870, %v871
        %v873 = vshll.u32 920167782, %v858
        %v874 = vshrl.u32 1326507024, %v859
        %v875 = vor.u32 %v873, %v874
        %vm876 = vcmp.lt.s32.totalorder %v857, 1
        %vm877 = vcmp.lt.s32.totalorder %v857, 2
        %vm878 = vcmp.lt.s32.totalorder %v857, 3
        %vm879 = vcmp.lt.s32.totalorder %v857, 4
        %v880 = vsel %vm876, %v860, %v863
        %v881 = vsel %vm879, %v869, 2102212464
        %v882 = vsel %vm878, %v866, %v881
        %v883 = vsel %vm877, %v880, %v882
        %v884 = vsel %vm876, %v863, %v866
        %v885 = vsel %vm879, %v872, 920167782
        %v886 = vsel %vm878, %v869, %v885
        %v887 = vsel %vm877, %v884, %v886
        %v888 = vsel %vm876, %v866, %v869
        %v889 = vsel %vm879, %v875, 1326507024
        %v890 = vsel %vm878, %v872, %v889
        %v891 = vsel %vm877, %v888, %v890
        %v892 = vshll.u32 %v852, 8
        %v893 = vand.u32 %v892, 65535
        %v894 = vshrl.u32 %v892, 16
        %v895 = vand.u32 %v891, 65535
        %v896 = vshrl.u32 %v891, 16
        %v897 = vmul.u32 %v893, %v895
        %v898 = vmul.u32 %v893, %v896
        %v899 = vmul.u32 %v894, %v895
        %v900 = vmul.u32 %v894, %v896
        %v901 = vshll.u32 %v898, 16
        %v902 = vshrl.u32 %v898, 16
        %v903 = vshll.u32 %v899, 16
        %v904 = vshrl.u32 %v899, 16
        %vm905 = vc.u32 %v897, %v901
        %v906 = vsel %vm905, 1, 0
        %v907 = vadd.s32 %v897, %v901
        %v908 = vadd.s32 %v900, %v906
        %vm909 = vc.u32 %v907, %v903
        %v910 = vsel %vm909, 1, 0
        %v911 = vadd.s32 %v907, %v903
        %v912 = vadd.s32 %v908, %v910
        %v913 = vadd.s32 %v912, %v902
        %v914 = vadd.s32 %v913, %v904
        %v915 = vand.u32 %v892, 65535
        %v916 = vshrl.u32 %v892, 16
        %v917 = vand.u32 %v887, 65535
        %v918 = vshrl.u32 %v887, 16
        %v919 = vmul.u32 %v915, %v917
        %v920 = vmul.u32 %v915, %v918
        %v921 = vmul.u32 %v916, %v917
        %v922 = vmul.u32 %v916, %v918
        %v923 = vshll.u32 %v920, 16
        %v924 = vshrl.u32 %v920, 16
        %v925 = vshll.u32 %v921, 16
        %v926 = vshrl.u32 %v921, 16
        %vm927 = vc.u32 %v919, %v923
        %v928 = vsel %vm927, 1, 0
        %v929 = vadd.s32 %v919, %v923
        %v930 = vadd.s32 %v922, %v928
        %vm931 = vc.u32 %v929, %v925
        %v932 = vsel %vm931, 1, 0
        %v933 = vadd.s32 %v929, %v925
        %v934 = vadd.s32 %v930, %v932
        %v935 = vadd.s32 %v934, %v924
        %v936 = vadd.s32 %v935, %v926
        %v937 = vmul.u32 %v892, %v883
        %v938 = vadd.s32 %v914, %v933
        %vm939 = vc.u32 %v914, %v933
        %v940 = vadd.s32 %v936, 1
        %v941 = vsel %vm939, %v940, %v936
        %v942 = vadd.s32 %v937, %v941
        %v943 = vadd.s32 %v942, 536870912
        %v944 = vshrl.u32 %v943, 30
        %v945 = vshll.u32 %v944, 30
        %v946 = vsub.s32 %v942, %v945
        %vm947 = vcmp.lt.s32.totalorder %v946, 0
        %v948 = vsub.s32 0, %v946
        %v949 = vsel %vm947, %v948, %v946
        %v950 = vclz %v949
        %v951 = vsub.s32 %v950, 2
        %vm952 = vcmp.gt.s32.totalorder 0, %v951
        %v953 = vsel %vm952, 0, %v951
        %v954 = vsub.s32 32, %v953
        %v955 = vshll.u32 %v946, %v953
        %v956 = vshrl.u32 %v938, %v954
        %v957 = vor.u32 %v955, %v956
        %v958 = vsub.s32 4294967266, %v953
        %v959 = vadd.s32 %v958, 127
        %v960 = vshll.u32 %v959, 23
        %v961 = vor.u32 4788187, %v960
        %v962 = vand.u32 2147483647, %v961
        %v964 = vcvt.s32.f32 %v957
        %v965 = vmul.f32 %v964, %v962
        %v966 = vxor.u32 %v965, 2147483648
        %v967 = vsel %vm846, %v966, %v965
        %v968 = vsub.s32 4, %v944
        %v969 = vsel %vm846, %v968, %v944
        %v970 = vsel %vm845, %v532, %v967
        %v971 = vsel %vm845, 0, %v969
        %v972 = vmul.f32 %v970, %v970
        %v973 = vmul.f32 %v972, -0.001358992
        %v974 = vadd.f32 %v973, 0.041655596
        %v975 = vmul.f32 %v972, %v974
        %v976 = vadd.f32 %v975, -0.4999988
        %v977 = vmul.f32 %v972, %v976
        %v978 = vadd.f32 1.0, %v977
        %v979 = vmul.f32 %v970, %v970
        %v980 = vmul.f32 %v979, -0.00019511016
        %v981 = vadd.f32 %v980, 0.008332121
        %v982 = vmul.f32 %v979, %v981
        %v983 = vadd.f32 %v982, -0.16666654
        %v984 = vmul.f32 %v979, %v983
        %v985 = vadd.f32 %v984, 1.0
        %v986 = vmul.f32 %v985, %v970
        %vm987 = vweird.f32 %v532
        %v988 = vadd.s32 %v971, 3
        %v989 = vand.u32 %v988, 3
        %vm990 = vcmp.lt.s32.totalorder %v989, 2
        %vm991 = vcmp.eq.s32.totalorder %v989, 0
        %v992 = vxor.u32 %v986, 2147483648
        %v993 = vsel %vm991, %v978, %v992
        %vm994 = vcmp.eq.s32.totalorder %v989, 2
        %v995 = vxor.u32 %v978, 2147483648
        %v996 = vsel %vm994, %v995, %v986
        %v997 = vsel %vm990, %v993, %v996
        %v998 = vsel %vm987, nan, %v997
        %v999 = vand.u32 2147483647, %v533
        %vm1000 = vcmp.le.f32.partialorder %v999, 0.7853982
        %vm1001 = vcmp.lt.s32.totalorder %v533, 0
        %v1002 = vand.u32 %v533, 2139095040
        %v1003 = vshrl.u32 %v1002, 23
        %v1004 = vsub.s32 %v1003, 127
        %v1005 = vand.u32 2147483647, %v533
        %v1006 = vand.u32 %v1005, 8388607
        %v1007 = vor.u32 %v1006, 8388608
        %v1008 = vsub.s32 0, %v1007
        %v1009 = vadd.s32 %v1004, 1
        %vm1010 = vcmp.gt.s32.totalorder %v1009, 0
        %v1011 = vsel %vm1010, %v1009, 0
        %v1012 = vshrl.u32 %v1011, 5
        %v1013 = vand.u32 %v1011, 31
        %v1014 = vsub.s32 32, %v1013
        %v1015 = vshrl.u32 683565275, %v1014
        %v1016 = vshll.u32 683565275, %v1013
        %v1017 = vshrl.u32 2475754826, %v1014
        %v1018 = vor.u32 %v1016, %v1017
        %v1019 = vshll.u32 2475754826, %v1013
        %v1020 = vshrl.u32 2131351028, %v1014
        %v1021 = vor.u32 %v1019, %v1020
        %v1022 = vshll.u32 2131351028, %v1013
        %v1023 = vshrl.u32 2102212464, %v1014
        %v1024 = vor.u32 %v1022, %v1023
        %v1025 = vshll.u32 2102212464, %v1013
        %v1026 = vshrl.u32 920167782, %v1014
        %v1027 = vor.u32 %v1025, %v1026
        %v1028 = vshll.u32 920167782, %v1013
        %v1029 = vshrl.u32 1326507024, %v1014
        %v1030 = vor.u32 %v1028, %v1029
        %vm1031 = vcmp.lt.s32.totalorder %v1012, 1
        %vm1032 = vcmp.lt.s32.totalorder %v1012, 2
        %vm1033 = vcmp.lt.s32.totalorder %v1012, 3
        %vm1034 = vcmp.lt.s32.totalorder %v1012, 4
        %v1035 = vsel %vm1031, %v1015, %v1018
        %v1036 = vsel %vm1034, %v1024, 2102212464
        %v1037 = vsel %vm1033, %v1021, %v1036
        %v1038 = vsel %vm1032, %v1035, %v1037
        %v1039 = vsel %vm1031, %v1018, %v1021
        %v1040 = vsel %vm1034, %v1027, 920167782
        %v1041 = vsel %vm1033, %v1024, %v1040
        %v1042 = vsel %vm1032, %v1039, %v1041
        %v1043 = vsel %vm1031, %v1021, %v1024
        %v1044 = vsel %vm1034, %v1030, 1326507024
        %v1045 = vsel %vm1033, %v1027, %v1044
        %v1046 = vsel %vm1032, %v1043, %v1045
        %v1047 = vshll.u32 %v1007, 8
        %v1048 = vand.u32 %v1047, 65535
        %v1049 = vshrl.u32 %v1047, 16
        %v1050 = vand.u32 %v1046, 65535
        %v1051 = vshrl.u32 %v1046, 16
        %v1052 = vmul.u32 %v1048, %v1050
        %v1053 = vmul.u32 %v1048, %v1051
        %v1054 = vmul.u32 %v1049, %v1050
        %v1055 = vmul.u32 %v1049, %v1051
        %v1056 = vshll.u32 %v1053, 16
        %v1057 = vshrl.u32 %v1053, 16
        %v1058 = vshll.u32 %v1054, 16
        %v1059 = vshrl.u32 %v1054, 16
        %vm1060 = vc.u32 %v1052, %v1056
        %v1061 = vsel %vm1060, 1, 0
        %v1062 = vadd.s32 %v1052, %v1056
        %v1063 = vadd.s32 %v1055, %v1061
        %vm1064 = vc.u32 %v1062, %v1058
        %v1065 = vsel %vm1064, 1, 0
        %v1066 = vadd.s32 %v1062, %v1058
        %v1067 = vadd.s32 %v1063, %v1065
        %v1068 = vadd.s32 %v1067, %v1057
        %v1069 = vadd.s32 %v1068, %v1059
        %v1070 = vand.u32 %v1047, 65535
        %v1071 = vshrl.u32 %v1047, 16
        %v1072 = vand.u32 %v1042, 65535
        %v1073 = vshrl.u32 %v1042, 16
        %v1074 = vmul.u32 %v1070, %v1072
        %v1075 = vmul.u32 %v1070, %v1073
        %v1076 = vmul.u32 %v1071, %v1072
        %v1077 = vmul.u32 %v1071, %v1073
        %v1078 = vshll.u32 %v1075, 16
        %v1079 = vshrl.u32 %v1075, 16
        %v1080 = vshll.u32 %v1076, 16
        %v1081 = vshrl.u32 %v1076, 16
        %vm1082 = vc.u32 %v1074, %v1078
        %v1083 = vsel %vm1082, 1, 0
        %v1084 = vadd.s32 %v1074, %v1078
        %v1085 = vadd.s32 %v1077, %v1083
        %vm1086 = vc.u32 %v1084, %v1080
        %v1087 = vsel %vm1086, 1, 0
        %v1088 = vadd.s32 %v1084, %v1080
        %v1089 = vadd.s32 %v1085, %v1087
        %v1090 = vadd.s32 %v1089, %v1079
        %v1091 = vadd.s32 %v1090, %v1081
        %v1092 = vmul.u32 %v1047, %v1038
        %v1093 = vadd.s32 %v1069, %v1088
        %vm1094 = vc.u32 %v1069, %v1088
        %v1095 = vadd.s32 %v1091, 1
        %v1096 = vsel %vm1094, %v1095, %v1091
        %v1097 = vadd.s32 %v1092, %v1096
        %v1098 = vadd.s32 %v1097, 536870912
        %v1099 = vshrl.u32 %v1098, 30
        %v1100 = vshll.u32 %v1099, 30
        %v1101 = vsub.s32 %v1097, %v1100
        %vm1102 = vcmp.lt.s32.totalorder %v1101, 0
        %v1103 = vsub.s32 0, %v1101
        %v1104 = vsel %vm1102, %v1103, %v1101
        %v1105 = vclz %v1104
        %v1106 = vsub.s32 %v1105, 2
        %vm1107 = vcmp.gt.s32.totalorder 0, %v1106
        %v1108 = vsel %vm1107, 0, %v1106
        %v1109 = vsub.s32 32, %v1108
        %v1110 = vshll.u32 %v1101, %v1108
        %v1111 = vshrl.u32 %v1093, %v1109
        %v1112 = vor.u32 %v1110, %v1111
        %v1113 = vsub.s32 4294967266, %v1108
        %v1114 = vadd.s32 %v1113, 127
        %v1115 = vshll.u32 %v1114, 23
        %v1116 = vor.u32 4788187, %v1115
        %v1117 = vand.u32 2147483647, %v1116
        %v1119 = vcvt.s32.f32 %v1112
        %v1120 = vmul.f32 %v1119, %v1117
        %v1121 = vxor.u32 %v1120, 2147483648
        %v1122 = vsel %vm1001, %v1121, %v1120
        %v1123 = vsub.s32 4, %v1099
        %v1124 = vsel %vm1001, %v1123, %v1099
        %v1125 = vsel %vm1000, %v533, %v1122
        %v1126 = vsel %vm1000, 0, %v1124
        %v1127 = vmul.f32 %v1125, %v1125
        %v1128 = vmul.f32 %v1127, -0.001358992
        %v1129 = vadd.f32 %v1128, 0.041655596
        %v1130 = vmul.f32 %v1127, %v1129
        %v1131 = vadd.f32 %v1130, -0.4999988
        %v1132 = vmul.f32 %v1127, %v1131
        %v1133 = vadd.f32 1.0, %v1132
        %v1134 = vmul.f32 %v1125, %v1125
        %v1135 = vmul.f32 %v1134, -0.00019511016
        %v1136 = vadd.f32 %v1135, 0.008332121
        %v1137 = vmul.f32 %v1134, %v1136
        %v1138 = vadd.f32 %v1137, -0.16666654
        %v1139 = vmul.f32 %v1134, %v1138
        %v1140 = vadd.f32 %v1139, 1.0
        %v1141 = vmul.f32 %v1140, %v1125
        %vm1142 = vweird.f32 %v533
        %v1143 = vadd.s32 %v1126, 3
        %v1144 = vand.u32 %v1143, 3
        %vm1145 = vcmp.lt.s32.totalorder %v1144, 2
        %vm1146 = vcmp.eq.s32.totalorder %v1144, 0
        %v1147 = vxor.u32 %v1141, 2147483648
        %v1148 = vsel %vm1146, %v1133, %v1147
        %vm1149 = vcmp.eq.s32.totalorder %v1144, 2
        %v1150 = vxor.u32 %v1133, 2147483648
        %v1151 = vsel %vm1149, %v1150, %v1141
        %v1152 = vsel %vm1145, %v1148, %v1151
        %v1153 = vsel %vm1142, nan, %v1152
        %v1154 = vand.u32 2147483647, %v530
        %vm1155 = vcmp.le.f32.partialorder %v1154, 0.7853982
        %vm1156 = vcmp.lt.s32.totalorder %v530, 0
        %v1157 = vand.u32 %v530, 2139095040
        %v1158 = vshrl.u32 %v1157, 23
        %v1159 = vsub.s32 %v1158, 127
        %v1160 = vand.u32 2147483647, %v530
        %v1161 = vand.u32 %v1160, 8388607
        %v1162 = vor.u32 %v1161, 8388608
        %v1163 = vsub.s32 0, %v1162
        %v1164 = vadd.s32 %v1159, 1
        %vm1165 = vcmp.gt.s32.totalorder %v1164, 0
        %v1166 = vsel %vm1165, %v1164, 0
        %v1167 = vshrl.u32 %v1166, 5
        %v1168 = vand.u32 %v1166, 31
        %v1169 = vsub.s32 32, %v1168
        %v1170 = vshrl.u32 683565275, %v1169
        %v1171 = vshll.u32 683565275, %v1168
        %v1172 = vshrl.u32 2475754826, %v1169
        %v1173 = vor.u32 %v1171, %v1172
        %v1174 = vshll.u32 2475754826, %v1168
        %v1175 = vshrl.u32 2131351028, %v1169
        %v1176 = vor.u32 %v1174, %v1175
        %v1177 = vshll.u32 2131351028, %v1168
        %v1178 = vshrl.u32 2102212464, %v1169
        %v1179 = vor.u32 %v1177, %v1178
        %v1180 = vshll.u32 2102212464, %v1168
        %v1181 = vshrl.u32 920167782, %v1169
        %v1182 = vor.u32 %v1180, %v1181
        %v1183 = vshll.u32 920167782, %v1168
        %v1184 = vshrl.u32 1326507024, %v1169
        %v1185 = vor.u32 %v1183, %v1184
        %vm1186 = vcmp.lt.s32.totalorder %v1167, 1
        %vm1187 = vcmp.lt.s32.totalorder %v1167, 2
        %vm1188 = vcmp.lt.s32.totalorder %v1167, 3
        %vm1189 = vcmp.lt.s32.totalorder %v1167, 4
        %v1190 = vsel %vm1186, %v1170, %v1173
        %v1191 = vsel %vm1189, %v1179, 2102212464
        %v1192 = vsel %vm1188, %v1176, %v1191
        %v1193 = vsel %vm1187, %v1190, %v1192
        %v1194 = vsel %vm1186, %v1173, %v1176
        %v1195 = vsel %vm1189, %v1182, 920167782
        %v1196 = vsel %vm1188, %v1179, %v1195
        %v1197 = vsel %vm1187, %v1194, %v1196
        %v1198 = vsel %vm1186, %v1176, %v1179
        %v1199 = vsel %vm1189, %v1185, 1326507024
        %v1200 = vsel %vm1188, %v1182, %v1199
        %v1201 = vsel %vm1187, %v1198, %v1200
        %v1202 = vshll.u32 %v1162, 8
        %v1203 = vand.u32 %v1202, 65535
        %v1204 = vshrl.u32 %v1202, 16
        %v1205 = vand.u32 %v1201, 65535
        %v1206 = vshrl.u32 %v1201, 16
        %v1207 = vmul.u32 %v1203, %v1205
        %v1208 = vmul.u32 %v1203, %v1206
        %v1209 = vmul.u32 %v1204, %v1205
        %v1210 = vmul.u32 %v1204, %v1206
        %v1211 = vshll.u32 %v1208, 16
        %v1212 = vshrl.u32 %v1208, 16
        %v1213 = vshll.u32 %v1209, 16
        %v1214 = vshrl.u32 %v1209, 16
        %vm1215 = vc.u32 %v1207, %v1211
        %v1216 = vsel %vm1215, 1, 0
        %v1217 = vadd.s32 %v1207, %v1211
        %v1218 = vadd.s32 %v1210, %v1216
        %vm1219 = vc.u32 %v1217, %v1213
        %v1220 = vsel %vm1219, 1, 0
        %v1221 = vadd.s32 %v1217, %v1213
        %v1222 = vadd.s32 %v1218, %v1220
        %v1223 = vadd.s32 %v1222, %v1212
        %v1224 = vadd.s32 %v1223, %v1214
        %v1225 = vand.u32 %v1202, 65535
        %v1226 = vshrl.u32 %v1202, 16
        %v1227 = vand.u32 %v1197, 65535
        %v1228 = vshrl.u32 %v1197, 16
        %v1229 = vmul.u32 %v1225, %v1227
        %v1230 = vmul.u32 %v1225, %v1228
        %v1231 = vmul.u32 %v1226, %v1227
        %v1232 = vmul.u32 %v1226, %v1228
        %v1233 = vshll.u32 %v1230, 16
        %v1234 = vshrl.u32 %v1230, 16
        %v1235 = vshll.u32 %v1231, 16
        %v1236 = vshrl.u32 %v1231, 16
        %vm1237 = vc.u32 %v1229, %v1233
        %v1238 = vsel %vm1237, 1, 0
        %v1239 = vadd.s32 %v1229, %v1233
        %v1240 = vadd.s32 %v1232, %v1238
        %vm1241 = vc.u32 %v1239, %v1235
        %v1242 = vsel %vm1241, 1, 0
        %v1243 = vadd.s32 %v1239, %v1235
        %v1244 = vadd.s32 %v1240, %v1242
        %v1245 = vadd.s32 %v1244, %v1234
        %v1246 = vadd.s32 %v1245, %v1236
        %v1247 = vmul.u32 %v1202, %v1193
        %v1248 = vadd.s32 %v1224, %v1243
        %vm1249 = vc.u32 %v1224, %v1243
        %v1250 = vadd.s32 %v1246, 1
        %v1251 = vsel %vm1249, %v1250, %v1246
        %v1252 = vadd.s32 %v1247, %v1251
        %v1253 = vadd.s32 %v1252, 536870912
        %v1254 = vshrl.u32 %v1253, 30
        %v1255 = vshll.u32 %v1254, 30
        %v1256 = vsub.s32 %v1252, %v1255
        %vm1257 = vcmp.lt.s32.totalorder %v1256, 0
        %v1258 = vsub.s32 0, %v1256
        %v1259 = vsel %vm1257, %v1258, %v1256
        %v1260 = vclz %v1259
        %v1261 = vsub.s32 %v1260, 2
        %vm1262 = vcmp.gt.s32.totalorder 0, %v1261
        %v1263 = vsel %vm1262, 0, %v1261
        %v1264 = vsub.s32 32, %v1263
        %v1265 = vshll.u32 %v1256, %v1263
        %v1266 = vshrl.u32 %v1248, %v1264
        %v1267 = vor.u32 %v1265, %v1266
        %v1268 = vsub.s32 4294967266, %v1263
        %v1269 = vadd.s32 %v1268, 127
        %v1270 = vshll.u32 %v1269, 23
        %v1271 = vor.u32 4788187, %v1270
        %v1272 = vand.u32 2147483647, %v1271
        %v1274 = vcvt.s32.f32 %v1267
        %v1275 = vmul.f32 %v1274, %v1272
        %v1276 = vxor.u32 %v1275, 2147483648
        %v1277 = vsel %vm1156, %v1276, %v1275
        %v1278 = vsub.s32 4, %v1254
        %v1279 = vsel %vm1156, %v1278, %v1254
        %v1280 = vsel %vm1155, %v530, %v1277
        %v1281 = vsel %vm1155, 0, %v1279
        %v1282 = vmul.f32 %v1280, %v1280
        %v1283 = vmul.f32 %v1282, -0.001358992
        %v1284 = vadd.f32 %v1283, 0.041655596
        %v1285 = vmul.f32 %v1282, %v1284
        %v1286 = vadd.f32 %v1285, -0.4999988
        %v1287 = vmul.f32 %v1282, %v1286
        %v1288 = vadd.f32 1.0, %v1287
        %v1289 = vmul.f32 %v1280, %v1280
        %v1290 = vmul.f32 %v1289, -0.00019511016
        %v1291 = vadd.f32 %v1290, 0.008332121
        %v1292 = vmul.f32 %v1289, %v1291
        %v1293 = vadd.f32 %v1292, -0.16666654
        %v1294 = vmul.f32 %v1289, %v1293
        %v1295 = vadd.f32 %v1294, 1.0
        %v1296 = vmul.f32 %v1295, %v1280
        %vm1297 = vweird.f32 %v530
        %v1298 = vand.u32 %v1281, 3
        %vm1299 = vcmp.lt.s32.totalorder %v1298, 2
        %vm1300 = vcmp.eq.s32.totalorder %v1298, 0
        %v1301 = vxor.u32 %v1296, 2147483648
        %v1302 = vsel %vm1300, %v1288, %v1301
        %vm1303 = vcmp.eq.s32.totalorder %v1298, 2
        %v1304 = vxor.u32 %v1288, 2147483648
        %v1305 = vsel %vm1303, %v1304, %v1296
        %v1306 = vsel %vm1299, %v1302, %v1305
        %v1307 = vsel %vm1297, nan, %v1306
        %v1308 = vand.u32 2147483647, %v531
        %vm1309 = vcmp.le.f32.partialorder %v1308, 0.7853982
        %vm1310 = vcmp.lt.s32.totalorder %v531, 0
        %v1311 = vand.u32 %v531, 2139095040
        %v1312 = vshrl.u32 %v1311, 23
        %v1313 = vsub.s32 %v1312, 127
        %v1314 = vand.u32 2147483647, %v531
        %v1315 = vand.u32 %v1314, 8388607
        %v1316 = vor.u32 %v1315, 8388608
        %v1317 = vsub.s32 0, %v1316
        %v1318 = vadd.s32 %v1313, 1
        %vm1319 = vcmp.gt.s32.totalorder %v1318, 0
        %v1320 = vsel %vm1319, %v1318, 0
        %v1321 = vshrl.u32 %v1320, 5
        %v1322 = vand.u32 %v1320, 31
        %v1323 = vsub.s32 32, %v1322
        %v1324 = vshrl.u32 683565275, %v1323
        %v1325 = vshll.u32 683565275, %v1322
        %v1326 = vshrl.u32 2475754826, %v1323
        %v1327 = vor.u32 %v1325, %v1326
        %v1328 = vshll.u32 2475754826, %v1322
        %v1329 = vshrl.u32 2131351028, %v1323
        %v1330 = vor.u32 %v1328, %v1329
        %v1331 = vshll.u32 2131351028, %v1322
        %v1332 = vshrl.u32 2102212464, %v1323
        %v1333 = vor.u32 %v1331, %v1332
        %v1334 = vshll.u32 2102212464, %v1322
        %v1335 = vshrl.u32 920167782, %v1323
        %v1336 = vor.u32 %v1334, %v1335
        %v1337 = vshll.u32 920167782, %v1322
        %v1338 = vshrl.u32 1326507024, %v1323
        %v1339 = vor.u32 %v1337, %v1338
        %vm1340 = vcmp.lt.s32.totalorder %v1321, 1
        %vm1341 = vcmp.lt.s32.totalorder %v1321, 2
        %vm1342 = vcmp.lt.s32.totalorder %v1321, 3
        %vm1343 = vcmp.lt.s32.totalorder %v1321, 4
        %v1344 = vsel %vm1340, %v1324, %v1327
        %v1345 = vsel %vm1343, %v1333, 2102212464
        %v1346 = vsel %vm1342, %v1330, %v1345
        %v1347 = vsel %vm1341, %v1344, %v1346
        %v1348 = vsel %vm1340, %v1327, %v1330
        %v1349 = vsel %vm1343, %v1336, 920167782
        %v1350 = vsel %vm1342, %v1333, %v1349
        %v1351 = vsel %vm1341, %v1348, %v1350
        %v1352 = vsel %vm1340, %v1330, %v1333
        %v1353 = vsel %vm1343, %v1339, 1326507024
        %v1354 = vsel %vm1342, %v1336, %v1353
        %v1355 = vsel %vm1341, %v1352, %v1354
        %v1356 = vshll.u32 %v1316, 8
        %v1357 = vand.u32 %v1356, 65535
        %v1358 = vshrl.u32 %v1356, 16
        %v1359 = vand.u32 %v1355, 65535
        %v1360 = vshrl.u32 %v1355, 16
        %v1361 = vmul.u32 %v1357, %v1359
        %v1362 = vmul.u32 %v1357, %v1360
        %v1363 = vmul.u32 %v1358, %v1359
        %v1364 = vmul.u32 %v1358, %v1360
        %v1365 = vshll.u32 %v1362, 16
        %v1366 = vshrl.u32 %v1362, 16
        %v1367 = vshll.u32 %v1363, 16
        %v1368 = vshrl.u32 %v1363, 16
        %vm1369 = vc.u32 %v1361, %v1365
        %v1370 = vsel %vm1369, 1, 0
        %v1371 = vadd.s32 %v1361, %v1365
        %v1372 = vadd.s32 %v1364, %v1370
        %vm1373 = vc.u32 %v1371, %v1367
        %v1374 = vsel %vm1373, 1, 0
        %v1375 = vadd.s32 %v1371, %v1367
        %v1376 = vadd.s32 %v1372, %v1374
        %v1377 = vadd.s32 %v1376, %v1366
        %v1378 = vadd.s32 %v1377, %v1368
        %v1379 = vand.u32 %v1356, 65535
        %v1380 = vshrl.u32 %v1356, 16
        %v1381 = vand.u32 %v1351, 65535
        %v1382 = vshrl.u32 %v1351, 16
        %v1383 = vmul.u32 %v1379, %v1381
        %v1384 = vmul.u32 %v1379, %v1382
        %v1385 = vmul.u32 %v1380, %v1381
        %v1386 = vmul.u32 %v1380, %v1382
        %v1387 = vshll.u32 %v1384, 16
        %v1388 = vshrl.u32 %v1384, 16
        %v1389 = vshll.u32 %v1385, 16
        %v1390 = vshrl.u32 %v1385, 16
        %vm1391 = vc.u32 %v1383, %v1387
        %v1392 = vsel %vm1391, 1, 0
        %v1393 = vadd.s32 %v1383, %v1387
        %v1394 = vadd.s32 %v1386, %v1392
        %vm1395 = vc.u32 %v1393, %v1389
        %v1396 = vsel %vm1395, 1, 0
        %v1397 = vadd.s32 %v1393, %v1389
        %v1398 = vadd.s32 %v1394, %v1396
        %v1399 = vadd.s32 %v1398, %v1388
        %v1400 = vadd.s32 %v1399, %v1390
        %v1401 = vmul.u32 %v1356, %v1347
        %v1402 = vadd.s32 %v1378, %v1397
        %vm1403 = vc.u32 %v1378, %v1397
        %v1404 = vadd.s32 %v1400, 1
        %v1405 = vsel %vm1403, %v1404, %v1400
        %v1406 = vadd.s32 %v1401, %v1405
        %v1407 = vadd.s32 %v1406, 536870912
        %v1408 = vshrl.u32 %v1407, 30
        %v1409 = vshll.u32 %v1408, 30
        %v1410 = vsub.s32 %v1406, %v1409
        %vm1411 = vcmp.lt.s32.totalorder %v1410, 0
        %v1412 = vsub.s32 0, %v1410
        %v1413 = vsel %vm1411, %v1412, %v1410
        %v1414 = vclz %v1413
        %v1415 = vsub.s32 %v1414, 2
        %vm1416 = vcmp.gt.s32.totalorder 0, %v1415
        %v1417 = vsel %vm1416, 0, %v1415
        %v1418 = vsub.s32 32, %v1417
        %v1419 = vshll.u32 %v1410, %v1417
        %v1420 = vshrl.u32 %v1402, %v1418
        %v1421 = vor.u32 %v1419, %v1420
        %v1422 = vsub.s32 4294967266, %v1417
        %v1423 = vadd.s32 %v1422, 127
        %v1424 = vshll.u32 %v1423, 23
        %v1425 = vor.u32 4788187, %v1424
        %v1426 = vand.u32 2147483647, %v1425
        %v1428 = vcvt.s32.f32 %v1421
        %v1429 = vmul.f32 %v1428, %v1426
        %v1430 = vxor.u32 %v1429, 2147483648
        %v1431 = vsel %vm1310, %v1430, %v1429
        %v1432 = vsub.s32 4, %v1408
        %v1433 = vsel %vm1310, %v1432, %v1408
        %v1434 = vsel %vm1309, %v531, %v1431
        %v1435 = vsel %vm1309, 0, %v1433
        %v1436 = vmul.f32 %v1434, %v1434
        %v1437 = vmul.f32 %v1436, -0.001358992
        %v1438 = vadd.f32 %v1437, 0.041655596
        %v1439 = vmul.f32 %v1436, %v1438
        %v1440 = vadd.f32 %v1439, -0.4999988
        %v1441 = vmul.f32 %v1436, %v1440
        %v1442 = vadd.f32 1.0, %v1441
        %v1443 = vmul.f32 %v1434, %v1434
        %v1444 = vmul.f32 %v1443, -0.00019511016
        %v1445 = vadd.f32 %v1444, 0.008332121
        %v1446 = vmul.f32 %v1443, %v1445
        %v1447 = vadd.f32 %v1446, -0.16666654
        %v1448 = vmul.f32 %v1443, %v1447
        %v1449 = vadd.f32 %v1448, 1.0
        %v1450 = vmul.f32 %v1449, %v1434
        %vm1451 = vweird.f32 %v531
        %v1452 = vand.u32 %v1435, 3
        %vm1453 = vcmp.lt.s32.totalorder %v1452, 2
        %vm1454 = vcmp.eq.s32.totalorder %v1452, 0
        %v1455 = vxor.u32 %v1450, 2147483648
        %v1456 = vsel %vm1454, %v1442, %v1455
        %vm1457 = vcmp.eq.s32.totalorder %v1452, 2
        %v1458 = vxor.u32 %v1442, 2147483648
        %v1459 = vsel %vm1457, %v1458, %v1450
        %v1460 = vsel %vm1453, %v1456, %v1459
        %v1461 = vsel %vm1451, nan, %v1460
        %v1462 = vand.u32 2147483647, %v532
        %vm1463 = vcmp.le.f32.partialorder %v1462, 0.7853982
        %vm1464 = vcmp.lt.s32.totalorder %v532, 0
        %v1465 = vand.u32 %v532, 2139095040
        %v1466 = vshrl.u32 %v1465, 23
        %v1467 = vsub.s32 %v1466, 127
        %v1468 = vand.u32 2147483647, %v532
        %v1469 = vand.u32 %v1468, 8388607
        %v1470 = vor.u32 %v1469, 8388608
        %v1471 = vsub.s32 0, %v1470
        %v1472 = vadd.s32 %v1467, 1
        %vm1473 = vcmp.gt.s32.totalorder %v1472, 0
        %v1474 = vsel %vm1473, %v1472, 0
        %v1475 = vshrl.u32 %v1474, 5
        %v1476 = vand.u32 %v1474, 31
        %v1477 = vsub.s32 32, %v1476
        %v1478 = vshrl.u32 683565275, %v1477
        %v1479 = vshll.u32 683565275, %v1476
        %v1480 = vshrl.u32 2475754826, %v1477
        %v1481 = vor.u32 %v1479, %v1480
        %v1482 = vshll.u32 2475754826, %v1476
        %v1483 = vshrl.u32 2131351028, %v1477
        %v1484 = vor.u32 %v1482, %v1483
        %v1485 = vshll.u32 2131351028, %v1476
        %v1486 = vshrl.u32 2102212464, %v1477
        %v1487 = vor.u32 %v1485, %v1486
        %v1488 = vshll.u32 2102212464, %v1476
        %v1489 = vshrl.u32 920167782, %v1477
        %v1490 = vor.u32 %v1488, %v1489
        %v1491 = vshll.u32 920167782, %v1476
        %v1492 = vshrl.u32 1326507024, %v1477
        %v1493 = vor.u32 %v1491, %v1492
        %vm1494 = vcmp.lt.s32.totalorder %v1475, 1
        %vm1495 = vcmp.lt.s32.totalorder %v1475, 2
        %vm1496 = vcmp.lt.s32.totalorder %v1475, 3
        %vm1497 = vcmp.lt.s32.totalorder %v1475, 4
        %v1498 = vsel %vm1494, %v1478, %v1481
        %v1499 = vsel %vm1497, %v1487, 2102212464
        %v1500 = vsel %vm1496, %v1484, %v1499
        %v1501 = vsel %vm1495, %v1498, %v1500
        %v1502 = vsel %vm1494, %v1481, %v1484
        %v1503 = vsel %vm1497, %v1490, 920167782
        %v1504 = vsel %vm1496, %v1487, %v1503
        %v1505 = vsel %vm1495, %v1502, %v1504
        %v1506 = vsel %vm1494, %v1484, %v1487
        %v1507 = vsel %vm1497, %v1493, 1326507024
        %v1508 = vsel %vm1496, %v1490, %v1507
        %v1509 = vsel %vm1495, %v1506, %v1508
        %v1510 = vshll.u32 %v1470, 8
        %v1511 = vand.u32 %v1510, 65535
        %v1512 = vshrl.u32 %v1510, 16
        %v1513 = vand.u32 %v1509, 65535
        %v1514 = vshrl.u32 %v1509, 16
        %v1515 = vmul.u32 %v1511, %v1513
        %v1516 = vmul.u32 %v1511, %v1514
        %v1517 = vmul.u32 %v1512, %v1513
        %v1518 = vmul.u32 %v1512, %v1514
        %v1519 = vshll.u32 %v1516, 16
        %v1520 = vshrl.u32 %v1516, 16
        %v1521 = vshll.u32 %v1517, 16
        %v1522 = vshrl.u32 %v1517, 16
        %vm1523 = vc.u32 %v1515, %v1519
        %v1524 = vsel %vm1523, 1, 0
        %v1525 = vadd.s32 %v1515, %v1519
        %v1526 = vadd.s32 %v1518, %v1524
        %vm1527 = vc.u32 %v1525, %v1521
        %v1528 = vsel %vm1527, 1, 0
        %v1529 = vadd.s32 %v1525, %v1521
        %v1530 = vadd.s32 %v1526, %v1528
        %v1531 = vadd.s32 %v1530, %v1520
        %v1532 = vadd.s32 %v1531, %v1522
        %v1533 = vand.u32 %v1510, 65535
        %v1534 = vshrl.u32 %v1510, 16
        %v1535 = vand.u32 %v1505, 65535
        %v1536 = vshrl.u32 %v1505, 16
        %v1537 = vmul.u32 %v1533, %v1535
        %v1538 = vmul.u32 %v1533, %v1536
        %v1539 = vmul.u32 %v1534, %v1535
        %v1540 = vmul.u32 %v1534, %v1536
        %v1541 = vshll.u32 %v1538, 16
        %v1542 = vshrl.u32 %v1538, 16
        %v1543 = vshll.u32 %v1539, 16
        %v1544 = vshrl.u32 %v1539, 16
        %vm1545 = vc.u32 %v1537, %v1541
        %v1546 = vsel %vm1545, 1, 0
        %v1547 = vadd.s32 %v1537, %v1541
        %v1548 = vadd.s32 %v1540, %v1546
        %vm1549 = vc.u32 %v1547, %v1543
        %v1550 = vsel %vm1549, 1, 0
        %v1551 = vadd.s32 %v1547, %v1543
        %v1552 = vadd.s32 %v1548, %v1550
        %v1553 = vadd.s32 %v1552, %v1542
        %v1554 = vadd.s32 %v1553, %v1544
        %v1555 = vmul.u32 %v1510, %v1501
        %v1556 = vadd.s32 %v1532, %v1551
        %vm1557 = vc.u32 %v1532, %v1551
        %v1558 = vadd.s32 %v1554, 1
        %v1559 = vsel %vm1557, %v1558, %v1554
        %v1560 = vadd.s32 %v1555, %v1559
        %v1561 = vadd.s32 %v1560, 536870912
        %v1562 = vshrl.u32 %v1561, 30
        %v1563 = vshll.u32 %v1562, 30
        %v1564 = vsub.s32 %v1560, %v1563
        %vm1565 = vcmp.lt.s32.totalorder %v1564, 0
        %v1566 = vsub.s32 0, %v1564
        %v1567 = vsel %vm1565, %v1566, %v1564
        %v1568 = vclz %v1567
        %v1569 = vsub.s32 %v1568, 2
        %vm1570 = vcmp.gt.s32.totalorder 0, %v1569
        %v1571 = vsel %vm1570, 0, %v1569
        %v1572 = vsub.s32 32, %v1571
        %v1573 = vshll.u32 %v1564, %v1571
        %v1574 = vshrl.u32 %v1556, %v1572
        %v1575 = vor.u32 %v1573, %v1574
        %v1576 = vsub.s32 4294967266, %v1571
        %v1577 = vadd.s32 %v1576, 127
        %v1578 = vshll.u32 %v1577, 23
        %v1579 = vor.u32 4788187, %v1578
        %v1580 = vand.u32 2147483647, %v1579
        %v1582 = vcvt.s32.f32 %v1575
        %v1583 = vmul.f32 %v1582, %v1580
        %v1584 = vxor.u32 %v1583, 2147483648
        %v1585 = vsel %vm1464, %v1584, %v1583
        %v1586 = vsub.s32 4, %v1562
        %v1587 = vsel %vm1464, %v1586, %v1562
        %v1588 = vsel %vm1463, %v532, %v1585
        %v1589 = vsel %vm1463, 0, %v1587
        %v1590 = vmul.f32 %v1588, %v1588
        %v1591 = vmul.f32 %v1590, -0.001358992
        %v1592 = vadd.f32 %v1591, 0.041655596
        %v1593 = vmul.f32 %v1590, %v1592
        %v1594 = vadd.f32 %v1593, -0.4999988
        %v1595 = vmul.f32 %v1590, %v1594
        %v1596 = vadd.f32 1.0, %v1595
        %v1597 = vmul.f32 %v1588, %v1588
        %v1598 = vmul.f32 %v1597, -0.00019511016
        %v1599 = vadd.f32 %v1598, 0.008332121
        %v1600 = vmul.f32 %v1597, %v1599
        %v1601 = vadd.f32 %v1600, -0.16666654
        %v1602 = vmul.f32 %v1597, %v1601
        %v1603 = vadd.f32 %v1602, 1.0
        %v1604 = vmul.f32 %v1603, %v1588
        %vm1605 = vweird.f32 %v532
        %v1606 = vand.u32 %v1589, 3
        %vm1607 = vcmp.lt.s32.totalorder %v1606, 2
        %vm1608 = vcmp.eq.s32.totalorder %v1606, 0
        %v1609 = vxor.u32 %v1604, 2147483648
        %v1610 = vsel %vm1608, %v1596, %v1609
        %vm1611 = vcmp.eq.s32.totalorder %v1606, 2
        %v1612 = vxor.u32 %v1596, 2147483648
        %v1613 = vsel %vm1611, %v1612, %v1604
        %v1614 = vsel %vm1607, %v1610, %v1613
        %v1615 = vsel %vm1605, nan, %v1614
        %v1616 = vand.u32 2147483647, %v533
        %vm1617 = vcmp.le.f32.partialorder %v1616, 0.7853982
        %vm1618 = vcmp.lt.s32.totalorder %v533, 0
        %v1619 = vand.u32 %v533, 2139095040
        %v1620 = vshrl.u32 %v1619, 23
        %v1621 = vsub.s32 %v1620, 127
        %v1622 = vand.u32 2147483647, %v533
        %v1623 = vand.u32 %v1622, 8388607
        %v1624 = vor.u32 %v1623, 8388608
        %v1625 = vsub.s32 0, %v1624
        %v1626 = vadd.s32 %v1621, 1
        %vm1627 = vcmp.gt.s32.totalorder %v1626, 0
        %v1628 = vsel %vm1627, %v1626, 0
        %v1629 = vshrl.u32 %v1628, 5
        %v1630 = vand.u32 %v1628, 31
        %v1631 = vsub.s32 32, %v1630
        %v1632 = vshrl.u32 683565275, %v1631
        %v1633 = vshll.u32 683565275, %v1630
        %v1634 = vshrl.u32 2475754826, %v1631
        %v1635 = vor.u32 %v1633, %v1634
        %v1636 = vshll.u32 2475754826, %v1630
        %v1637 = vshrl.u32 2131351028, %v1631
        %v1638 = vor.u32 %v1636, %v1637
        %v1639 = vshll.u32 2131351028, %v1630
        %v1640 = vshrl.u32 2102212464, %v1631
        %v1641 = vor.u32 %v1639, %v1640
        %v1642 = vshll.u32 2102212464, %v1630
        %v1643 = vshrl.u32 920167782, %v1631
        %v1644 = vor.u32 %v1642, %v1643
        %v1645 = vshll.u32 920167782, %v1630
        %v1646 = vshrl.u32 1326507024, %v1631
        %v1647 = vor.u32 %v1645, %v1646
        %vm1648 = vcmp.lt.s32.totalorder %v1629, 1
        %vm1649 = vcmp.lt.s32.totalorder %v1629, 2
        %vm1650 = vcmp.lt.s32.totalorder %v1629, 3
        %vm1651 = vcmp.lt.s32.totalorder %v1629, 4
        %v1652 = vsel %vm1648, %v1632, %v1635
        %v1653 = vsel %vm1651, %v1641, 2102212464
        %v1654 = vsel %vm1650, %v1638, %v1653
        %v1655 = vsel %vm1649, %v1652, %v1654
        %v1656 = vsel %vm1648, %v1635, %v1638
        %v1657 = vsel %vm1651, %v1644, 920167782
        %v1658 = vsel %vm1650, %v1641, %v1657
        %v1659 = vsel %vm1649, %v1656, %v1658
        %v1660 = vsel %vm1648, %v1638, %v1641
        %v1661 = vsel %vm1651, %v1647, 1326507024
        %v1662 = vsel %vm1650, %v1644, %v1661
        %v1663 = vsel %vm1649, %v1660, %v1662
        %v1664 = vshll.u32 %v1624, 8
        %v1665 = vand.u32 %v1664, 65535
        %v1666 = vshrl.u32 %v1664, 16
        %v1667 = vand.u32 %v1663, 65535
        %v1668 = vshrl.u32 %v1663, 16
        %v1669 = vmul.u32 %v1665, %v1667
        %v1670 = vmul.u32 %v1665, %v1668
        %v1671 = vmul.u32 %v1666, %v1667
        %v1672 = vmul.u32 %v1666, %v1668
        %v1673 = vshll.u32 %v1670, 16
        %v1674 = vshrl.u32 %v1670, 16
        %v1675 = vshll.u32 %v1671, 16
        %v1676 = vshrl.u32 %v1671, 16
        %vm1677 = vc.u32 %v1669, %v1673
        %v1678 = vsel %vm1677, 1, 0
        %v1679 = vadd.s32 %v1669, %v1673
        %v1680 = vadd.s32 %v1672, %v1678
        %vm1681 = vc.u32 %v1679, %v1675
        %v1682 = vsel %vm1681, 1, 0
        %v1683 = vadd.s32 %v1679, %v1675
        %v1684 = vadd.s32 %v1680, %v1682
        %v1685 = vadd.s32 %v1684, %v1674
        %v1686 = vadd.s32 %v1685, %v1676
        %v1687 = vand.u32 %v1664, 65535
        %v1688 = vshrl.u32 %v1664, 16
        %v1689 = vand.u32 %v1659, 65535
        %v1690 = vshrl.u32 %v1659, 16
        %v1691 = vmul.u32 %v1687, %v1689
        %v1692 = vmul.u32 %v1687, %v1690
        %v1693 = vmul.u32 %v1688, %v1689
        %v1694 = vmul.u32 %v1688, %v1690
        %v1695 = vshll.u32 %v1692, 16
        %v1696 = vshrl.u32 %v1692, 16
        %v1697 = vshll.u32 %v1693, 16
        %v1698 = vshrl.u32 %v1693, 16
        %vm1699 = vc.u32 %v1691, %v1695
        %v1700 = vsel %vm1699, 1, 0
        %v1701 = vadd.s32 %v1691, %v1695
        %v1702 = vadd.s32 %v1694, %v1700
        %vm1703 = vc.u32 %v1701, %v1697
        %v1704 = vsel %vm1703, 1, 0
        %v1705 = vadd.s32 %v1701, %v1697
        %v1706 = vadd.s32 %v1702, %v1704
        %v1707 = vadd.s32 %v1706, %v1696
        %v1708 = vadd.s32 %v1707, %v1698
        %v1709 = vmul.u32 %v1664, %v1655
        %v1710 = vadd.s32 %v1686, %v1705
        %vm1711 = vc.u32 %v1686, %v1705
        %v1712 = vadd.s32 %v1708, 1
        %v1713 = vsel %vm1711, %v1712, %v1708
        %v1714 = vadd.s32 %v1709, %v1713
        %v1715 = vadd.s32 %v1714, 536870912
        %v1716 = vshrl.u32 %v1715, 30
        %v1717 = vshll.u32 %v1716, 30
        %v1718 = vsub.s32 %v1714, %v1717
        %vm1719 = vcmp.lt.s32.totalorder %v1718, 0
        %v1720 = vsub.s32 0, %v1718
        %v1721 = vsel %vm1719, %v1720, %v1718
        %v1722 = vclz %v1721
        %v1723 = vsub.s32 %v1722, 2
        %vm1724 = vcmp.gt.s32.totalorder 0, %v1723
        %v1725 = vsel %vm1724, 0, %v1723
        %v1726 = vsub.s32 32, %v1725
        %v1727 = vshll.u32 %v1718, %v1725
        %v1728 = vshrl.u32 %v1710, %v1726
        %v1729 = vor.u32 %v1727, %v1728
        %v1730 = vsub.s32 4294967266, %v1725
        %v1731 = vadd.s32 %v1730, 127
        %v1732 = vshll.u32 %v1731, 23
        %v1733 = vor.u32 4788187, %v1732
        %v1734 = vand.u32 2147483647, %v1733
        %v1736 = vcvt.s32.f32 %v1729
        %v1737 = vmul.f32 %v1736, %v1734
        %v1738 = vxor.u32 %v1737, 2147483648
        %v1739 = vsel %vm1618, %v1738, %v1737
        %v1740 = vsub.s32 4, %v1716
        %v1741 = vsel %vm1618, %v1740, %v1716
        %v1742 = vsel %vm1617, %v533, %v1739
        %v1743 = vsel %vm1617, 0, %v1741
        %v1744 = vmul.f32 %v1742, %v1742
        %v1745 = vmul.f32 %v1744, -0.001358992
        %v1746 = vadd.f32 %v1745, 0.041655596
        %v1747 = vmul.f32 %v1744, %v1746
        %v1748 = vadd.f32 %v1747, -0.4999988
        %v1749 = vmul.f32 %v1744, %v1748
        %v1750 = vadd.f32 1.0, %v1749
        %v1751 = vmul.f32 %v1742, %v1742
        %v1752 = vmul.f32 %v1751, -0.00019511016
        %v1753 = vadd.f32 %v1752, 0.008332121
        %v1754 = vmul.f32 %v1751, %v1753
        %v1755 = vadd.f32 %v1754, -0.16666654
        %v1756 = vmul.f32 %v1751, %v1755
        %v1757 = vadd.f32 %v1756, 1.0
        %v1758 = vmul.f32 %v1757, %v1742
        %vm1759 = vweird.f32 %v533
        %v1760 = vand.u32 %v1743, 3
        %vm1761 = vcmp.lt.s32.totalorder %v1760, 2
        %vm1762 = vcmp.eq.s32.totalorder %v1760, 0
        %v1763 = vxor.u32 %v1758, 2147483648
        %v1764 = vsel %vm1762, %v1750, %v1763
        %vm1765 = vcmp.eq.s32.totalorder %v1760, 2
        %v1766 = vxor.u32 %v1750, 2147483648
        %v1767 = vsel %vm1765, %v1766, %v1758
        %v1768 = vsel %vm1761, %v1764, %v1767
        %v1769 = vsel %vm1759, nan, %v1768
        %v1770 = vld [vmem:[%s3] sm:$0xff]
        %v1771 = vld [vmem:[%s3 + $0x8] sm:$0xff]
        %v1772 = vld [vmem:[%s3 + $0x10] sm:$0xff]
        %v1773 = vld [vmem:[%s3 + $0x18] sm:$0xff]
        %v1774 = vld [vmem:[%s4] sm:$0xff]
        %v1775 = vld [vmem:[%s4 + $0x8] sm:$0xff]
        %v1776 = vld [vmem:[%s4 + $0x10] sm:$0xff]
        %v1777 = vld [vmem:[%s4 + $0x18] sm:$0xff]
        %v1778 = vld [vmem:[%s5] sm:$0xff]
        %v1779 = vld [vmem:[%s5 + $0x8] sm:$0xff]
        %v1780 = vld [vmem:[%s5 + $0x10] sm:$0xff]
        %v1781 = vld [vmem:[%s5 + $0x18] sm:$0xff]
        %v1782 = vld [vmem:[%s5 + $0x20] sm:$0xff]
        %v1783 = vld [vmem:[%s5 + $0x28] sm:$0xff]
        %v1784 = vld [vmem:[%s5 + $0x30] sm:$0xff]
        %v1785 = vld [vmem:[%s5 + $0x38] sm:$0xff]
        %v1786 = vld [vmem:[%s5 + $0x40] sm:$0xff]
        %v1787 = vld [vmem:[%s5 + $0x48] sm:$0xff]
        %v1788 = vld [vmem:[%s5 + $0x50] sm:$0xff]
        %v1789 = vld [vmem:[%s5 + $0x58] sm:$0xff]
        %v1790 = vld [vmem:[%s5 + $0x60] sm:$0xff]
        %v1791 = vld [vmem:[%s5 + $0x68] sm:$0xff]
        %v1792 = vld [vmem:[%s5 + $0x70] sm:$0xff]
        %v1793 = vld [vmem:[%s5 + $0x78] sm:$0xff]
        %v1794 = vld [vmem:[%s6] sm:$0xff]
        %v1795 = vld [vmem:[%s6 + $0x8] sm:$0xff]
        %v1796 = vld [vmem:[%s6 + $0x10] sm:$0xff]
        %v1797 = vld [vmem:[%s6 + $0x18] sm:$0xff]
        %v1798 = vld [vmem:[%s7] sm:$0xff]
        %v1799 = vld [vmem:[%s7 + $0x8] sm:$0xff]
        %v1800 = vld [vmem:[%s7 + $0x10] sm:$0xff]
        %v1801 = vld [vmem:[%s7 + $0x18] sm:$0xff]
        %v1802 = vld [vmem:[%s7 + $0x20] sm:$0xff]
        %v1803 = vld [vmem:[%s7 + $0x28] sm:$0xff]
        %v1804 = vld [vmem:[%s7 + $0x30] sm:$0xff]
        %v1805 = vld [vmem:[%s7 + $0x38] sm:$0xff]
        %v1806 = vld [vmem:[%s7 + $0x40] sm:$0xff]
        %v1807 = vld [vmem:[%s7 + $0x48] sm:$0xff]
        %v1808 = vld [vmem:[%s7 + $0x50] sm:$0xff]
        %v1809 = vld [vmem:[%s7 + $0x58] sm:$0xff]
        %v1810 = vld [vmem:[%s7 + $0x60] sm:$0xff]
        %v1811 = vld [vmem:[%s7 + $0x68] sm:$0xff]
        %v1812 = vld [vmem:[%s7 + $0x70] sm:$0xff]
        %v1813 = vld [vmem:[%s7 + $0x78] sm:$0xff]
        %v1814 = vld [vmem:[%s7 + $0x80] sm:$0xff]
        %v1815 = vld [vmem:[%s7 + $0x88] sm:$0xff]
        %v1816 = vld [vmem:[%s7 + $0x90] sm:$0xff]
        %v1817 = vld [vmem:[%s7 + $0x98] sm:$0xff]
        %v1818 = vld [vmem:[%s8] sm:$0xff]
        %v1819 = vld [vmem:[%s8 + $0x8] sm:$0xff]
        %v1820 = vld [vmem:[%s8 + $0x10] sm:$0xff]
        %v1821 = vld [vmem:[%s8 + $0x18] sm:$0xff]
        %v1822 = vld [vmem:[%s8 + $0x20] sm:$0xff]
        %v1823 = vld [vmem:[%s8 + $0x28] sm:$0xff]
        %v1824 = vld [vmem:[%s8 + $0x30] sm:$0xff]
        %v1825 = vld [vmem:[%s8 + $0x38] sm:$0xff]
        %v1826 = vld [vmem:[%s8 + $0x40] sm:$0xff]
        %v1827 = vld [vmem:[%s8 + $0x48] sm:$0xff]
        %v1828 = vld [vmem:[%s8 + $0x50] sm:$0xff]
        %v1829 = vld [vmem:[%s8 + $0x58] sm:$0xff]
        %v1830 = vld [vmem:[%s8 + $0x60] sm:$0xff]
        %v1831 = vld [vmem:[%s8 + $0x68] sm:$0xff]
        %v1832 = vld [vmem:[%s8 + $0x70] sm:$0xff]
        %v1833 = vld [vmem:[%s8 + $0x78] sm:$0xff]
        %v1834 = vld [vmem:[%s8 + $0x80] sm:$0xff]
        %v1835 = vld [vmem:[%s8 + $0x88] sm:$0xff]
        %v1836 = vld [vmem:[%s8 + $0x90] sm:$0xff]
        %v1837 = vld [vmem:[%s8 + $0x98] sm:$0xff]
        %1839 = vset.pattern.permute.xlu0 0
        %1840 = vperm.xlu0 %1839, %v1818
        %v1841 = vpop.permute.xlu0 %1840
        %1844 = vset.pattern.permute.xlu0 0
        %1845 = vperm.xlu0 %1844, %v1819
        %v1846 = vpop.permute.xlu0 %1845
        %1849 = vset.pattern.permute.xlu0 0
        %1850 = vperm.xlu0 %1849, %v1820
        %v1851 = vpop.permute.xlu0 %1850
        %1854 = vset.pattern.permute.xlu0 0
        %1855 = vperm.xlu0 %1854, %v1821
        %v1856 = vpop.permute.xlu0 %1855
        %1859 = vset.pattern.permute.xlu0 0
        %1860 = vperm.xlu0 %1859, %v1822
        %v1861 = vpop.permute.xlu0 %1860
        %1864 = vset.pattern.permute.xlu0 0
        %1865 = vperm.xlu0 %1864, %v1823
        %v1866 = vpop.permute.xlu0 %1865
        %1869 = vset.pattern.permute.xlu0 0
        %1870 = vperm.xlu0 %1869, %v1824
        %v1871 = vpop.permute.xlu0 %1870
        %1874 = vset.pattern.permute.xlu0 0
        %1875 = vperm.xlu0 %1874, %v1825
        %v1876 = vpop.permute.xlu0 %1875
        %1879 = vset.pattern.permute.xlu0 0
        %1880 = vperm.xlu0 %1879, %v1826
        %v1881 = vpop.permute.xlu0 %1880
        %1884 = vset.pattern.permute.xlu0 0
        %1885 = vperm.xlu0 %1884, %v1827
        %v1886 = vpop.permute.xlu0 %1885
        %1889 = vset.pattern.permute.xlu0 0
        %1890 = vperm.xlu0 %1889, %v1828
        %v1891 = vpop.permute.xlu0 %1890
        %1894 = vset.pattern.permute.xlu0 0
        %1895 = vperm.xlu0 %1894, %v1829
        %v1896 = vpop.permute.xlu0 %1895
        %1899 = vset.pattern.permute.xlu0 0
        %1900 = vperm.xlu0 %1899, %v1830
        %v1901 = vpop.permute.xlu0 %1900
        %1904 = vset.pattern.permute.xlu0 0
        %1905 = vperm.xlu0 %1904, %v1831
        %v1906 = vpop.permute.xlu0 %1905
        %1909 = vset.pattern.permute.xlu0 0
        %1910 = vperm.xlu0 %1909, %v1832
        %v1911 = vpop.permute.xlu0 %1910
        %1914 = vset.pattern.permute.xlu0 0
        %1915 = vperm.xlu0 %1914, %v1833
        %v1916 = vpop.permute.xlu0 %1915
        %1919 = vset.pattern.permute.xlu0 0
        %1920 = vperm.xlu0 %1919, %v1834
        %v1921 = vpop.permute.xlu0 %1920
        %1924 = vset.pattern.permute.xlu0 0
        %1925 = vperm.xlu0 %1924, %v1835
        %v1926 = vpop.permute.xlu0 %1925
        %1929 = vset.pattern.permute.xlu0 0
        %1930 = vperm.xlu0 %1929, %v1836
        %v1931 = vpop.permute.xlu0 %1930
        %1934 = vset.pattern.permute.xlu0 0
        %1935 = vperm.xlu0 %1934, %v1837
        %v1936 = vpop.permute.xlu0 %1935
        %vm1938 = vcmask 261120
        %v1940 = vsel %vm1938, %v1798, 0
        %v1943 = vsel %vm1938, %v1799, 0
        %v1946 = vsel %vm1938, %v1800, 0
        %v1949 = vsel %vm1938, %v1801, 0
        %v1952 = vsel %vm1938, %v1802, 0
        %v1955 = vsel %vm1938, %v1803, 0
        %v1958 = vsel %vm1938, %v1804, 0
        %v1961 = vsel %vm1938, %v1805, 0
        %v1964 = vsel %vm1938, %v1806, 0
        %v1967 = vsel %vm1938, %v1807, 0
        %v1970 = vsel %vm1938, %v1808, 0
        %v1973 = vsel %vm1938, %v1809, 0
        %v1976 = vsel %vm1938, %v1810, 0
        %v1979 = vsel %vm1938, %v1811, 0
        %v1982 = vsel %vm1938, %v1812, 0
        %v1985 = vsel %vm1938, %v1813, 0
        %v1988 = vsel %vm1938, %v1814, 0
        %v1991 = vsel %vm1938, %v1815, 0
        %v1994 = vsel %vm1938, %v1816, 0
        %v1997 = vsel %vm1938, %v1817, 0
        %1999 = vmatpush.msra.mxu0 0.0
        %2000 = vmatpush.msra.mxu0 0.0
        %2001 = vmatpush.msra.mxu0 0.0
        %2002 = vmatpush.msra.mxu0 0.0
        %2003 = vmatpush.msra.mxu0 0.0
        %2004 = vmatpush.msra.mxu0 0.0
        %2005 = vmatpush.msra.mxu0 0.0
        %2006 = vmatpush.msra.mxu0 0.0
        %2007 = vmatpush.msra.mxu0 0.0
        %2008 = vmatpush.msra.mxu0 0.0
        %2009 = vmatpush.msra.mxu0 0.0
        %2010 = vmatpush.msra.mxu0 0.0
        %2011 = vmatpush.msra.mxu0 %v454
        %2012 = vmatpush.msra.mxu0 %v453
        %2013 = vmatpush.msra.mxu0 %v452
        %2014 = vmatpush.msra.mxu0 %v451
        %2015 = vmatmul.f32.gmra.mxu0 %v1940
        %v2016 = vpop.f32.mrf.mxu0
        %v2017 = vadd.f32 %v1841, %v2016
        %2018 = vmatmul.f32.gmra.mxu0 %v1943
        %v2019 = vpop.f32.mrf.mxu0
        %v2020 = vadd.f32 %v1846, %v2019
        %2021 = vmatmul.f32.gmra.mxu0 %v1946
        %v2022 = vpop.f32.mrf.mxu0
        %v2023 = vadd.f32 %v1851, %v2022
        %2024 = vmatmul.f32.gmra.mxu0 %v1949
        %v2025 = vpop.f32.mrf.mxu0
        %v2026 = vadd.f32 %v1856, %v2025
        %2027 = vmatmul.f32.gmra.mxu0 %v1952
        %v2028 = vpop.f32.mrf.mxu0
        %v2029 = vadd.f32 %v1861, %v2028
        %2030 = vmatmul.f32.gmra.mxu0 %v1955
        %v2031 = vpop.f32.mrf.mxu0
        %v2032 = vadd.f32 %v1866, %v2031
        %2033 = vmatmul.f32.gmra.mxu0 %v1958
        %v2034 = vpop.f32.mrf.mxu0
        %v2035 = vadd.f32 %v1871, %v2034
        %2036 = vmatmul.f32.gmra.mxu0 %v1961
        %v2037 = vpop.f32.mrf.mxu0
        %v2038 = vadd.f32 %v1876, %v2037
        %2039 = vmatmul.f32.gmra.mxu0 %v1964
        %v2040 = vpop.f32.mrf.mxu0
        %v2041 = vadd.f32 %v1881, %v2040
        %2042 = vmatmul.f32.gmra.mxu0 %v1967
        %v2043 = vpop.f32.mrf.mxu0
        %v2044 = vadd.f32 %v1886, %v2043
        %2045 = vmatmul.f32.gmra.mxu0 %v1970
        %v2046 = vpop.f32.mrf.mxu0
        %v2047 = vadd.f32 %v1891, %v2046
        %2048 = vmatmul.f32.gmra.mxu0 %v1973
        %v2049 = vpop.f32.mrf.mxu0
        %v2050 = vadd.f32 %v1896, %v2049
        %2051 = vmatmul.f32.gmra.mxu0 %v1976
        %v2052 = vpop.f32.mrf.mxu0
        %v2053 = vadd.f32 %v1901, %v2052
        %2054 = vmatmul.f32.gmra.mxu0 %v1979
        %v2055 = vpop.f32.mrf.mxu0
        %v2056 = vadd.f32 %v1906, %v2055
        %2057 = vmatmul.f32.gmra.mxu0 %v1982
        %v2058 = vpop.f32.mrf.mxu0
        %v2059 = vadd.f32 %v1911, %v2058
        %2060 = vmatmul.f32.gmra.mxu0 %v1985
        %v2061 = vpop.f32.mrf.mxu0
        %v2062 = vadd.f32 %v1916, %v2061
        %2063 = vmatmul.f32.gmra.mxu0 %v1988
        %v2064 = vpop.f32.mrf.mxu0
        %v2065 = vadd.f32 %v1921, %v2064
        %2066 = vmatmul.f32.gmra.mxu0 %v1991
        %v2067 = vpop.f32.mrf.mxu0
        %v2068 = vadd.f32 %v1926, %v2067
        %2069 = vmatmul.f32.gmra.mxu0 %v1994
        %v2070 = vpop.f32.mrf.mxu0
        %v2071 = vadd.f32 %v1931, %v2070
        %2072 = vmatmul.f32.gmra.mxu0 %v1997
        %v2073 = vpop.f32.mrf.mxu0
        %v2074 = vadd.f32 %v1936, %v2073
        %2075 = vdwg.mxu0
        %2080 = vrot.lane.b32.xlu0 %v1770, 120
        %v2081 = vpop.permute.xlu0 %2080
        %2082 = vrot.lane.b32.xlu0 %v1771, 120
        %v2083 = vpop.permute.xlu0 %2082
        %2084 = vrot.lane.b32.xlu0 %v1772, 120
        %v2085 = vpop.permute.xlu0 %2084
        %2086 = vrot.lane.b32.xlu0 %v1773, 120
        %v2087 = vpop.permute.xlu0 %2086
        %v2088 = vsel %vm1938, %v2081, 0
        %v2090 = vsel %vm1938, %v2083, 0
        %v2092 = vsel %vm1938, %v2085, 0
        %v2094 = vsel %vm1938, %v2087, 0
        %2096 = vmatpush.msra.mxu0 0.0
        %2097 = vmatpush.msra.mxu0 0.0
        %2098 = vmatpush.msra.mxu0 0.0
        %2099 = vmatpush.msra.mxu0 0.0
        %2100 = vmatpush.msra.mxu0 0.0
        %2101 = vmatpush.msra.mxu0 0.0
        %2102 = vmatpush.msra.mxu0 0.0
        %2103 = vmatpush.msra.mxu0 0.0
        %2104 = vmatpush.msra.mxu0 0.0
        %2105 = vmatpush.msra.mxu0 0.0
        %2106 = vmatpush.msra.mxu0 0.0
        %2107 = vmatpush.msra.mxu0 0.0
        %2108 = vmatpush.msra.mxu0 %v1153
        %2109 = vmatpush.msra.mxu0 %v998
        %2110 = vmatpush.msra.mxu0 %v843
        %2111 = vmatpush.msra.mxu0 %v688
        %2112 = vmatmul.f32.gmra.mxu0 %v2088
        %v2113 = vpop.f32.mrf.mxu0
        %v2114 = vadd.f32 0.0, %v2113
        %2115 = vmatmul.f32.gmra.mxu0 %v2090
        %v2116 = vpop.f32.mrf.mxu0
        %v2117 = vadd.f32 0.0, %v2116
        %2118 = vmatmul.f32.gmra.mxu0 %v2092
        %v2119 = vpop.f32.mrf.mxu0
        %v2120 = vadd.f32 0.0, %v2119
        %2121 = vmatmul.f32.gmra.mxu0 %v2094
        %v2122 = vpop.f32.mrf.mxu0
        %v2123 = vadd.f32 0.0, %v2122
        %2124 = vdwg.mxu0
        %vm2125 = vcmask 64512
        %v2126 = vsel %vm2125, %v1770, 0
        %v2128 = vsel %vm2125, %v1771, 0
        %v2130 = vsel %vm2125, %v1772, 0
        %v2132 = vsel %vm2125, %v1773, 0
        %2134 = vmatpush.msra.mxu0 0.0
        %2135 = vmatpush.msra.mxu0 0.0
        %2136 = vmatpush.msra.mxu0 0.0
        %2137 = vmatpush.msra.mxu0 0.0
        %2138 = vmatpush.msra.mxu0 0.0
        %2139 = vmatpush.msra.mxu0 0.0
        %2140 = vmatpush.msra.mxu0 0.0
        %2141 = vmatpush.msra.mxu0 0.0
        %2142 = vmatpush.msra.mxu0 0.0
        %2143 = vmatpush.msra.mxu0 0.0
        %2144 = vmatpush.msra.mxu0 0.0
        %2145 = vmatpush.msra.mxu0 0.0
        %2146 = vmatpush.msra.mxu0 0.0
        %2147 = vmatpush.msra.mxu0 0.0
        %2148 = vmatpush.msra.mxu0 0.0
        %2149 = vmatpush.msra.mxu0 %v450
        %2150 = vmatmul.f32.gmra.mxu0 %v2126
        %v2151 = vpop.f32.mrf.mxu0
        %v2152 = vadd.f32 %v2114, %v2151
        %2153 = vmatmul.f32.gmra.mxu0 %v2128
        %v2154 = vpop.f32.mrf.mxu0
        %v2155 = vadd.f32 %v2117, %v2154
        %2156 = vmatmul.f32.gmra.mxu0 %v2130
        %v2157 = vpop.f32.mrf.mxu0
        %v2158 = vadd.f32 %v2120, %v2157
        %2159 = vmatmul.f32.gmra.mxu0 %v2132
        %v2160 = vpop.f32.mrf.mxu0
        %v2161 = vadd.f32 %v2123, %v2160
        %2162 = vdwg.mxu0
        %2163 = vrot.lane.b32.xlu0 %v1770, 88
        %v2164 = vpop.permute.xlu0 %2163
        %2165 = vrot.lane.b32.xlu0 %v1771, 88
        %v2166 = vpop.permute.xlu0 %2165
        %2167 = vrot.lane.b32.xlu0 %v1772, 88
        %v2168 = vpop.permute.xlu0 %2167
        %2169 = vrot.lane.b32.xlu0 %v1773, 88
        %v2170 = vpop.permute.xlu0 %2169
        %v2171 = vsel %vm1938, %v2164, 0
        %v2173 = vsel %vm1938, %v2166, 0
        %v2175 = vsel %vm1938, %v2168, 0
        %v2177 = vsel %vm1938, %v2170, 0
        %2179 = vmatpush.msra.mxu0 0.0
        %2180 = vmatpush.msra.mxu0 0.0
        %2181 = vmatpush.msra.mxu0 0.0
        %2182 = vmatpush.msra.mxu0 0.0
        %2183 = vmatpush.msra.mxu0 0.0
        %2184 = vmatpush.msra.mxu0 0.0
        %2185 = vmatpush.msra.mxu0 0.0
        %2186 = vmatpush.msra.mxu0 0.0
        %2187 = vmatpush.msra.mxu0 0.0
        %2188 = vmatpush.msra.mxu0 0.0
        %2189 = vmatpush.msra.mxu0 0.0
        %2190 = vmatpush.msra.mxu0 0.0
        %2191 = vmatpush.msra.mxu0 %v1769
        %2192 = vmatpush.msra.mxu0 %v1615
        %2193 = vmatpush.msra.mxu0 %v1461
        %2194 = vmatpush.msra.mxu0 %v1307
        %2195 = vmatmul.f32.gmra.mxu0 %v2171
        %v2196 = vpop.f32.mrf.mxu0
        %v2197 = vadd.f32 0.0, %v2196
        %2198 = vmatmul.f32.gmra.mxu0 %v2173
        %v2199 = vpop.f32.mrf.mxu0
        %v2200 = vadd.f32 0.0, %v2199
        %2201 = vmatmul.f32.gmra.mxu0 %v2175
        %v2202 = vpop.f32.mrf.mxu0
        %v2203 = vadd.f32 0.0, %v2202
        %2204 = vmatmul.f32.gmra.mxu0 %v2177
        %v2205 = vpop.f32.mrf.mxu0
        %v2206 = vadd.f32 0.0, %v2205
        %2207 = vdwg.mxu0
        %v2208 = vadd.f32 %v2152, %v2197
        %v2209 = vadd.f32 %v2155, %v2200
        %v2210 = vadd.f32 %v2158, %v2203
        %v2211 = vadd.f32 %v2161, %v2206
        %2213 = vset.pattern.permute.xlu0 0
        %2214 = vperm.xlu0 %2213, %v1794
        %v2215 = vpop.permute.xlu0 %2214
        %2218 = vset.pattern.permute.xlu0 0
        %2219 = vperm.xlu0 %2218, %v1795
        %v2220 = vpop.permute.xlu0 %2219
        %2223 = vset.pattern.permute.xlu0 0
        %2224 = vperm.xlu0 %2223, %v1796
        %v2225 = vpop.permute.xlu0 %2224
        %2228 = vset.pattern.permute.xlu0 0
        %2229 = vperm.xlu0 %2228, %v1797
        %v2230 = vpop.permute.xlu0 %2229
        %v2232 = vadd.f32 %v2208, %v2215
        %v2233 = vadd.f32 %v2209, %v2220
        %v2234 = vadd.f32 %v2210, %v2225
        %v2235 = vadd.f32 %v2211, %v2230
        %v2236 = vmax.f32 %v2232, 0.0
        %v2237 = vmax.f32 %v2233, 0.0
        %v2238 = vmax.f32 %v2234, 0.0
        %v2239 = vmax.f32 %v2235, 0.0
        %v2240 = vadd.f32 %v2236, %v2017
        %v2241 = vadd.f32 %v2237, %v2020
        %v2242 = vadd.f32 %v2238, %v2023
        %v2243 = vadd.f32 %v2239, %v2026
        %2244 = vset.pattern.permute.xlu0 1
        %2245 = vperm.xlu0 %2244, %v1794
        %v2246 = vpop.permute.xlu0 %2245
        %2248 = vset.pattern.permute.xlu0 1
        %2249 = vperm.xlu0 %2248, %v1795
        %v2250 = vpop.permute.xlu0 %2249
        %2252 = vset.pattern.permute.xlu0 1
        %2253 = vperm.xlu0 %2252, %v1796
        %v2254 = vpop.permute.xlu0 %2253
        %2256 = vset.pattern.permute.xlu0 1
        %2257 = vperm.xlu0 %2256, %v1797
        %v2258 = vpop.permute.xlu0 %2257
        %v2261 = vsel %vm1938, %v1778, 0
        %v2264 = vsel %vm1938, %v1779, 0
        %v2267 = vsel %vm1938, %v1780, 0
        %v2270 = vsel %vm1938, %v1781, 0
        %2272 = vmatpush.msra.mxu0 0.0
        %2273 = vmatpush.msra.mxu0 0.0
        %2274 = vmatpush.msra.mxu0 0.0
        %2275 = vmatpush.msra.mxu0 0.0
        %2276 = vmatpush.msra.mxu0 0.0
        %2277 = vmatpush.msra.mxu0 0.0
        %2278 = vmatpush.msra.mxu0 0.0
        %2279 = vmatpush.msra.mxu0 0.0
        %2280 = vmatpush.msra.mxu0 0.0
        %2281 = vmatpush.msra.mxu0 0.0
        %2282 = vmatpush.msra.mxu0 0.0
        %2283 = vmatpush.msra.mxu0 0.0
        %2284 = vmatpush.msra.mxu0 %v2243
        %2285 = vmatpush.msra.mxu0 %v2242
        %2286 = vmatpush.msra.mxu0 %v2241
        %2287 = vmatpush.msra.mxu0 %v2240
        %2288 = vmatmul.f32.gmra.mxu0 %v2261
        %v2289 = vpop.f32.mrf.mxu0
        %v2290 = vadd.f32 %v2246, %v2289
        %2291 = vmatmul.f32.gmra.mxu0 %v2264
        %v2292 = vpop.f32.mrf.mxu0
        %v2293 = vadd.f32 %v2250, %v2292
        %2294 = vmatmul.f32.gmra.mxu0 %v2267
        %v2295 = vpop.f32.mrf.mxu0
        %v2296 = vadd.f32 %v2254, %v2295
        %2297 = vmatmul.f32.gmra.mxu0 %v2270
        %v2298 = vpop.f32.mrf.mxu0
        %v2299 = vadd.f32 %v2258, %v2298
        %2300 = vdwg.mxu0
        %v2301 = vmax.f32 %v2290, 0.0
        %v2302 = vmax.f32 %v2293, 0.0
        %v2303 = vmax.f32 %v2296, 0.0
        %v2304 = vmax.f32 %v2299, 0.0
        %v2305 = vadd.f32 %v2301, %v2029
        %v2306 = vadd.f32 %v2302, %v2032
        %v2307 = vadd.f32 %v2303, %v2035
        %v2308 = vadd.f32 %v2304, %v2038
        %2309 = vset.pattern.permute.xlu0 2
        %2310 = vperm.xlu0 %2309, %v1794
        %v2311 = vpop.permute.xlu0 %2310
        %2313 = vset.pattern.permute.xlu0 2
        %2314 = vperm.xlu0 %2313, %v1795
        %v2315 = vpop.permute.xlu0 %2314
        %2317 = vset.pattern.permute.xlu0 2
        %2318 = vperm.xlu0 %2317, %v1796
        %v2319 = vpop.permute.xlu0 %2318
        %2321 = vset.pattern.permute.xlu0 2
        %2322 = vperm.xlu0 %2321, %v1797
        %v2323 = vpop.permute.xlu0 %2322
        %v2326 = vsel %vm1938, %v1782, 0
        %v2329 = vsel %vm1938, %v1783, 0
        %v2332 = vsel %vm1938, %v1784, 0
        %v2335 = vsel %vm1938, %v1785, 0
        %2337 = vmatpush.msra.mxu0 0.0
        %2338 = vmatpush.msra.mxu0 0.0
        %2339 = vmatpush.msra.mxu0 0.0
        %2340 = vmatpush.msra.mxu0 0.0
        %2341 = vmatpush.msra.mxu0 0.0
        %2342 = vmatpush.msra.mxu0 0.0
        %2343 = vmatpush.msra.mxu0 0.0
        %2344 = vmatpush.msra.mxu0 0.0
        %2345 = vmatpush.msra.mxu0 0.0
        %2346 = vmatpush.msra.mxu0 0.0
        %2347 = vmatpush.msra.mxu0 0.0
        %2348 = vmatpush.msra.mxu0 0.0
        %2349 = vmatpush.msra.mxu0 %v2308
        %2350 = vmatpush.msra.mxu0 %v2307
        %2351 = vmatpush.msra.mxu0 %v2306
        %2352 = vmatpush.msra.mxu0 %v2305
        %2353 = vmatmul.f32.gmra.mxu0 %v2326
        %v2354 = vpop.f32.mrf.mxu0
        %v2355 = vadd.f32 %v2311, %v2354
        %2356 = vmatmul.f32.gmra.mxu0 %v2329
        %v2357 = vpop.f32.mrf.mxu0
        %v2358 = vadd.f32 %v2315, %v2357
        %2359 = vmatmul.f32.gmra.mxu0 %v2332
        %v2360 = vpop.f32.mrf.mxu0
        %v2361 = vadd.f32 %v2319, %v2360
        %2362 = vmatmul.f32.gmra.mxu0 %v2335
        %v2363 = vpop.f32.mrf.mxu0
        %v2364 = vadd.f32 %v2323, %v2363
        %2365 = vdwg.mxu0
        %v2366 = vmax.f32 %v2355, 0.0
        %v2367 = vmax.f32 %v2358, 0.0
        %v2368 = vmax.f32 %v2361, 0.0
        %v2369 = vmax.f32 %v2364, 0.0
        %v2370 = vadd.f32 %v2366, %v2041
        %v2371 = vadd.f32 %v2367, %v2044
        %v2372 = vadd.f32 %v2368, %v2047
        %v2373 = vadd.f32 %v2369, %v2050
        %2378 = vrot.lane.b32.xlu0 %v1774, 120
        %v2379 = vpop.permute.xlu0 %2378
        %2380 = vrot.lane.b32.xlu0 %v1775, 120
        %v2381 = vpop.permute.xlu0 %2380
        %2382 = vrot.lane.b32.xlu0 %v1776, 120
        %v2383 = vpop.permute.xlu0 %2382
        %2384 = vrot.lane.b32.xlu0 %v1777, 120
        %v2385 = vpop.permute.xlu0 %2384
        %v2386 = vsel %vm1938, %v2379, 0
        %v2388 = vsel %vm1938, %v2381, 0
        %v2390 = vsel %vm1938, %v2383, 0
        %v2392 = vsel %vm1938, %v2385, 0
        %2394 = vmatpush.msra.mxu0 0.0
        %2395 = vmatpush.msra.mxu0 0.0
        %2396 = vmatpush.msra.mxu0 0.0
        %2397 = vmatpush.msra.mxu0 0.0
        %2398 = vmatpush.msra.mxu0 0.0
        %2399 = vmatpush.msra.mxu0 0.0
        %2400 = vmatpush.msra.mxu0 0.0
        %2401 = vmatpush.msra.mxu0 0.0
        %2402 = vmatpush.msra.mxu0 0.0
        %2403 = vmatpush.msra.mxu0 0.0
        %2404 = vmatpush.msra.mxu0 0.0
        %2405 = vmatpush.msra.mxu0 0.0
        %2406 = vmatpush.msra.mxu0 %v1153
        %2407 = vmatpush.msra.mxu0 %v998
        %2408 = vmatpush.msra.mxu0 %v843
        %2409 = vmatpush.msra.mxu0 %v688
        %2410 = vmatmul.f32.gmra.mxu0 %v2386
        %v2411 = vpop.f32.mrf.mxu0
        %v2412 = vadd.f32 0.0, %v2411
        %2413 = vmatmul.f32.gmra.mxu0 %v2388
        %v2414 = vpop.f32.mrf.mxu0
        %v2415 = vadd.f32 0.0, %v2414
        %2416 = vmatmul.f32.gmra.mxu0 %v2390
        %v2417 = vpop.f32.mrf.mxu0
        %v2418 = vadd.f32 0.0, %v2417
        %2419 = vmatmul.f32.gmra.mxu0 %v2392
        %v2420 = vpop.f32.mrf.mxu0
        %v2421 = vadd.f32 0.0, %v2420
        %2422 = vdwg.mxu0
        %v2423 = vsel %vm2125, %v1774, 0
        %v2425 = vsel %vm2125, %v1775, 0
        %v2427 = vsel %vm2125, %v1776, 0
        %v2429 = vsel %vm2125, %v1777, 0
        %2431 = vmatpush.msra.mxu0 0.0
        %2432 = vmatpush.msra.mxu0 0.0
        %2433 = vmatpush.msra.mxu0 0.0
        %2434 = vmatpush.msra.mxu0 0.0
        %2435 = vmatpush.msra.mxu0 0.0
        %2436 = vmatpush.msra.mxu0 0.0
        %2437 = vmatpush.msra.mxu0 0.0
        %2438 = vmatpush.msra.mxu0 0.0
        %2439 = vmatpush.msra.mxu0 0.0
        %2440 = vmatpush.msra.mxu0 0.0
        %2441 = vmatpush.msra.mxu0 0.0
        %2442 = vmatpush.msra.mxu0 0.0
        %2443 = vmatpush.msra.mxu0 0.0
        %2444 = vmatpush.msra.mxu0 0.0
        %2445 = vmatpush.msra.mxu0 0.0
        %2446 = vmatpush.msra.mxu0 %v450
        %2447 = vmatmul.f32.gmra.mxu0 %v2423
        %v2448 = vpop.f32.mrf.mxu0
        %v2449 = vadd.f32 %v2412, %v2448
        %2450 = vmatmul.f32.gmra.mxu0 %v2425
        %v2451 = vpop.f32.mrf.mxu0
        %v2452 = vadd.f32 %v2415, %v2451
        %2453 = vmatmul.f32.gmra.mxu0 %v2427
        %v2454 = vpop.f32.mrf.mxu0
        %v2455 = vadd.f32 %v2418, %v2454
        %2456 = vmatmul.f32.gmra.mxu0 %v2429
        %v2457 = vpop.f32.mrf.mxu0
        %v2458 = vadd.f32 %v2421, %v2457
        %2459 = vdwg.mxu0
        %2460 = vrot.lane.b32.xlu0 %v1774, 88
        %v2461 = vpop.permute.xlu0 %2460
        %2462 = vrot.lane.b32.xlu0 %v1775, 88
        %v2463 = vpop.permute.xlu0 %2462
        %2464 = vrot.lane.b32.xlu0 %v1776, 88
        %v2465 = vpop.permute.xlu0 %2464
        %2466 = vrot.lane.b32.xlu0 %v1777, 88
        %v2467 = vpop.permute.xlu0 %2466
        %v2468 = vsel %vm1938, %v2461, 0
        %v2470 = vsel %vm1938, %v2463, 0
        %v2472 = vsel %vm1938, %v2465, 0
        %v2474 = vsel %vm1938, %v2467, 0
        %2476 = vmatpush.msra.mxu0 0.0
        %2477 = vmatpush.msra.mxu0 0.0
        %2478 = vmatpush.msra.mxu0 0.0
        %2479 = vmatpush.msra.mxu0 0.0
        %2480 = vmatpush.msra.mxu0 0.0
        %2481 = vmatpush.msra.mxu0 0.0
        %2482 = vmatpush.msra.mxu0 0.0
        %2483 = vmatpush.msra.mxu0 0.0
        %2484 = vmatpush.msra.mxu0 0.0
        %2485 = vmatpush.msra.mxu0 0.0
        %2486 = vmatpush.msra.mxu0 0.0
        %2487 = vmatpush.msra.mxu0 0.0
        %2488 = vmatpush.msra.mxu0 %v1769
        %2489 = vmatpush.msra.mxu0 %v1615
        %2490 = vmatpush.msra.mxu0 %v1461
        %2491 = vmatpush.msra.mxu0 %v1307
        %2492 = vmatmul.f32.gmra.mxu0 %v2468
        %v2493 = vpop.f32.mrf.mxu0
        %v2494 = vadd.f32 0.0, %v2493
        %2495 = vmatmul.f32.gmra.mxu0 %v2470
        %v2496 = vpop.f32.mrf.mxu0
        %v2497 = vadd.f32 0.0, %v2496
        %2498 = vmatmul.f32.gmra.mxu0 %v2472
        %v2499 = vpop.f32.mrf.mxu0
        %v2500 = vadd.f32 0.0, %v2499
        %2501 = vmatmul.f32.gmra.mxu0 %v2474
        %v2502 = vpop.f32.mrf.mxu0
        %v2503 = vadd.f32 0.0, %v2502
        %2504 = vdwg.mxu0
        %v2505 = vadd.f32 %v2449, %v2494
        %v2506 = vadd.f32 %v2452, %v2497
        %v2507 = vadd.f32 %v2455, %v2500
        %v2508 = vadd.f32 %v2458, %v2503
        %v2510 = vsel %vm1938, %v1786, 0
        %v2513 = vsel %vm1938, %v1787, 0
        %v2516 = vsel %vm1938, %v1788, 0
        %v2519 = vsel %vm1938, %v1789, 0
        %2521 = vmatpush.msra.mxu0 0.0
        %2522 = vmatpush.msra.mxu0 0.0
        %2523 = vmatpush.msra.mxu0 0.0
        %2524 = vmatpush.msra.mxu0 0.0
        %2525 = vmatpush.msra.mxu0 0.0
        %2526 = vmatpush.msra.mxu0 0.0
        %2527 = vmatpush.msra.mxu0 0.0
        %2528 = vmatpush.msra.mxu0 0.0
        %2529 = vmatpush.msra.mxu0 0.0
        %2530 = vmatpush.msra.mxu0 0.0
        %2531 = vmatpush.msra.mxu0 0.0
        %2532 = vmatpush.msra.mxu0 0.0
        %2533 = vmatpush.msra.mxu0 %v2373
        %2534 = vmatpush.msra.mxu0 %v2372
        %2535 = vmatpush.msra.mxu0 %v2371
        %2536 = vmatpush.msra.mxu0 %v2370
        %2537 = vmatmul.f32.gmra.mxu0 %v2510
        %v2538 = vpop.f32.mrf.mxu0
        %v2539 = vadd.f32 %v2505, %v2538
        %2540 = vmatmul.f32.gmra.mxu0 %v2513
        %v2541 = vpop.f32.mrf.mxu0
        %v2542 = vadd.f32 %v2506, %v2541
        %2543 = vmatmul.f32.gmra.mxu0 %v2516
        %v2544 = vpop.f32.mrf.mxu0
        %v2545 = vadd.f32 %v2507, %v2544
        %2546 = vmatmul.f32.gmra.mxu0 %v2519
        %v2547 = vpop.f32.mrf.mxu0
        %v2548 = vadd.f32 %v2508, %v2547
        %2549 = vdwg.mxu0
        %2550 = vset.pattern.permute.xlu0 3
        %2551 = vperm.xlu0 %2550, %v1794
        %v2552 = vpop.permute.xlu0 %2551
        %2554 = vset.pattern.permute.xlu0 3
        %2555 = vperm.xlu0 %2554, %v1795
        %v2556 = vpop.permute.xlu0 %2555
        %2558 = vset.pattern.permute.xlu0 3
        %2559 = vperm.xlu0 %2558, %v1796
        %v2560 = vpop.permute.xlu0 %2559
        %2562 = vset.pattern.permute.xlu0 3
        %2563 = vperm.xlu0 %2562, %v1797
        %v2564 = vpop.permute.xlu0 %2563
        %v2566 = vadd.f32 %v2539, %v2552
        %v2567 = vadd.f32 %v2542, %v2556
        %v2568 = vadd.f32 %v2545, %v2560
        %v2569 = vadd.f32 %v2548, %v2564
        %v2570 = vmax.f32 %v2566, 0.0
        %v2571 = vmax.f32 %v2567, 0.0
        %v2572 = vmax.f32 %v2568, 0.0
        %v2573 = vmax.f32 %v2569, 0.0
        %v2574 = vadd.f32 %v2570, %v2053
        %v2575 = vadd.f32 %v2571, %v2056
        %v2576 = vadd.f32 %v2572, %v2059
        %v2577 = vadd.f32 %v2573, %v2062
        %2578 = vset.pattern.permute.xlu0 4
        %2579 = vperm.xlu0 %2578, %v1794
        %v2580 = vpop.permute.xlu0 %2579
        %2582 = vset.pattern.permute.xlu0 4
        %2583 = vperm.xlu0 %2582, %v1795
        %v2584 = vpop.permute.xlu0 %2583
        %2586 = vset.pattern.permute.xlu0 4
        %2587 = vperm.xlu0 %2586, %v1796
        %v2588 = vpop.permute.xlu0 %2587
        %2590 = vset.pattern.permute.xlu0 4
        %2591 = vperm.xlu0 %2590, %v1797
        %v2592 = vpop.permute.xlu0 %2591
        %v2595 = vsel %vm1938, %v1790, 0
        %v2598 = vsel %vm1938, %v1791, 0
        %v2601 = vsel %vm1938, %v1792, 0
        %v2604 = vsel %vm1938, %v1793, 0
        %2606 = vmatpush.msra.mxu0 0.0
        %2607 = vmatpush.msra.mxu0 0.0
        %2608 = vmatpush.msra.mxu0 0.0
        %2609 = vmatpush.msra.mxu0 0.0
        %2610 = vmatpush.msra.mxu0 0.0
        %2611 = vmatpush.msra.mxu0 0.0
        %2612 = vmatpush.msra.mxu0 0.0
        %2613 = vmatpush.msra.mxu0 0.0
        %2614 = vmatpush.msra.mxu0 0.0
        %2615 = vmatpush.msra.mxu0 0.0
        %2616 = vmatpush.msra.mxu0 0.0
        %2617 = vmatpush.msra.mxu0 0.0
        %2618 = vmatpush.msra.mxu0 %v2577
        %2619 = vmatpush.msra.mxu0 %v2576
        %2620 = vmatpush.msra.mxu0 %v2575
        %2621 = vmatpush.msra.mxu0 %v2574
        %2622 = vmatmul.f32.gmra.mxu0 %v2595
        %v2623 = vpop.f32.mrf.mxu0
        %v2624 = vadd.f32 %v2580, %v2623
        %2625 = vmatmul.f32.gmra.mxu0 %v2598
        %v2626 = vpop.f32.mrf.mxu0
        %v2627 = vadd.f32 %v2584, %v2626
        %2628 = vmatmul.f32.gmra.mxu0 %v2601
        %v2629 = vpop.f32.mrf.mxu0
        %v2630 = vadd.f32 %v2588, %v2629
        %2631 = vmatmul.f32.gmra.mxu0 %v2604
        %v2632 = vpop.f32.mrf.mxu0
        %v2633 = vadd.f32 %v2592, %v2632
        %2634 = vdwg.mxu0
        %v2635 = vmax.f32 %v2624, 0.0
        %v2636 = vmax.f32 %v2627, 0.0
        %v2637 = vmax.f32 %v2630, 0.0
        %v2638 = vmax.f32 %v2633, 0.0
        %v2639 = vadd.f32 %v2635, %v2065
        %v2640 = vadd.f32 %v2636, %v2068
        %v2641 = vadd.f32 %v2637, %v2071
        %v2642 = vadd.f32 %v2638, %v2074
        %v2643 = vld [vmem:[%s9] sm:$0xff]
        %v2644 = vld [vmem:[%s9 + $0x8] sm:$0xff]
        %v2645 = vld [vmem:[%s9 + $0x10] sm:$0xff]
        %v2646 = vld [vmem:[%s9 + $0x18] sm:$0xff]
        %2648 = vset.pattern.permute.xlu0 0
        %2649 = vperm.xlu0 %2648, %v2643
        %v2650 = vpop.permute.xlu0 %2649
        %2653 = vset.pattern.permute.xlu0 0
        %2654 = vperm.xlu0 %2653, %v2644
        %v2655 = vpop.permute.xlu0 %2654
        %2658 = vset.pattern.permute.xlu0 0
        %2659 = vperm.xlu0 %2658, %v2645
        %v2660 = vpop.permute.xlu0 %2659
        %2663 = vset.pattern.permute.xlu0 0
        %2664 = vperm.xlu0 %2663, %v2646
        %v2665 = vpop.permute.xlu0 %2664
        %v2667 = vmul.f32 %v2639, %v2650
        %v2668 = vmul.f32 %v2640, %v2655
        %v2669 = vmul.f32 %v2641, %v2660
        %v2670 = vmul.f32 %v2642, %v2665
        %v2671 = vadd.f32 %v2667, %v2668
        %v2672 = vadd.f32 %v2671, %v2669
        %v2673 = vadd.f32 %v2672, %v2670
        %v2674 = vrot.slane %v2673, 4
        %v2675 = vadd.f32 %v2673, %v2674
        %v2676 = vrot.slane %v2675, 2
        %v2677 = vadd.f32 %v2675, %v2676
        %v2678 = vrot.slane %v2677, 1
        %v2679 = vadd.f32 %v2677, %v2678
        %v2680 = vld [vmem:[#allocation2] sm:$0x1]
        %2682 = vset.pattern.permute.xlu0 0
        %2683 = vperm.xlu0 %2682, %v2680
        %v2684 = vpop.permute.xlu0 %2683
        %v2686 = vperm.slane %v2684, 0
        %v2687 = vadd.f32 %v2679, %v2686
        %2688 = vst [vmem:[%s445] sm:$0x1] %v2687
        %s2689 = sand.u32 %s276, 1
        %s2690 = scalar_lea.sflag [#allocation5], %s2689
        %s2691 = sand.u32 %s276, 1
        %s2692 = scalar_lea.vmem [#allocation4], %s2691
        // Predicated region
        $region103: #{tpu_custom_call.1} parent=97 // pred_check
          %p2693 = pneg %p286
        $region104: #{tpu_custom_call.1} parent=97 // pred_check_branch
          %2695 = sbr.rel (%p2693) target = $region106
        $region105: #{tpu_custom_call.1} parent=97 // pred_region
          %2697 = vsyncadd %s2690, 0
          %s2698 = scalar_lea.hbm %s11, %s27
          %s2700 = sshll.u32 %s2692, 4
          %s2701 = int_to_ptr.vmem [resolvable:$true] %s2700
          %s2702 = sshll.u32 %s2698, 4
          %s2703 = int_to_ptr.hbm [resolvable:$true] %s2702
          %2705 = dma.vmem_to_hbm [thread:$0]  %s2701, 16, %s2703, %s2690
        $region106: #{tpu_custom_call.1} parent=97 // pred_fallthru
          _
      $region98: #{tpu_custom_call.1} parent=5 // pred_fallthru
        _
      %p2706 = scmp.le.s32.totalorder 2, %s22
      // Predicated region
      $region107: #{tpu_custom_call.1} parent=5 // pred_check
        %p2707 = pneg %p2706
      $region108: #{tpu_custom_call.1} parent=5 // pred_check_branch
        %2709 = sbr.rel (%p2707) target = $region110
      $region109: #{tpu_custom_call.1} parent=5 // pred_region
        %s2710 = ssub.s32 %s22, 2
        // Predicated region
        $region111: #{tpu_custom_call.1} parent=109 // pred_check
          %p2711 = pneg %p292
        $region112: #{tpu_custom_call.1} parent=109 // pred_check_branch
          %2713 = sbr.rel (%p2711) target = $region114
        $region113: #{tpu_custom_call.1} parent=109 // pred_region
          %s2714 = sand.u32 %s277, 1
          %s2715 = scalar_lea.sflag [#allocation5], %s2714
          %s2716 = sand.u32 %s277, 1
          %s2717 = scalar_lea.vmem [#allocation4], %s2716
          %2719 = dma.done %s2715, 16
        $region114: #{tpu_custom_call.1} parent=109 // pred_fallthru
          _
      $region110: #{tpu_custom_call.1} parent=5 // pred_fallthru
        _
    $region6: #{tpu_custom_call.1} parent=1 // loop_footer
      %s26 = sadd.s32 1, %s22
    $region7: #{tpu_custom_call.1} parent=1 // loop_footer_branch
      %21 = sbr.rel target = $region3
    $region8: #{tpu_custom_call.1} parent=1 // loop_exit
      _
    %2720 = vsyncpa [#allocation5], 1
    %s2721 = scalar_lea.sflag [#allocation5], 1
    %2722 = vsyncpa %s2721, 1

</llo_original>
